<compile_context>
chip_gen: v7x
topology: tpu7x:2x2x1
jax: 0.10.0
libtpu: 0.0.40
codegen_flags: <defaults>
</compile_context>

<pallas_src>
import numpy as np
import jax
import jax.numpy as jnp
from jax import lax
from jax.experimental import pallas as pl
from jax.experimental.pallas import tpu as pltpu

LN_EPS = 1e-5   # torch.nn.LayerNorm default eps
CN_EPS = 1e-6   # CoordNorm eps


def node_ff_kernel(coords_ref, nodef_ref, mask_ref,
                   nodevec_ref, wfused_ref, bfused_ref, w1l_ref, w2_ref,
                   wpa_ref, svec_ref,
                   coords_out_ref, nodef_out_ref):
    coords = coords_ref[...]          # [Bt, S, 3, N]  (N lane-minor)
    feats = nodef_ref[...]            # [Bt, N, D]
    mask = mask_ref[...]              # [Bt, S, N]

    Bt, S, _, N = coords.shape
    D = feats.shape[-1]
    P = wpa_ref.shape[0]
    d_ff = wfused_ref.shape[-1] - P

    gamma = nodevec_ref[0]            # [D]  LayerNorm weight
    beta = nodevec_ref[1]             # [D]  LayerNorm bias
    b2 = nodevec_ref[2]               # [D]  LengthsMLP second bias
    set_w = svec_ref[0]               # [S]  CoordNorm set_weights
    wc_colsum = svec_ref[1]           # [S]  column-sum of coord_proj weight
    bpa = svec_ref[2]                 # [S]  bp2 @ wa (precomposed bias)

    # ---- LayerNorm(d_model) on node features (one-pass stats, clamped) ----
    mu = jnp.mean(feats, axis=-1, keepdims=True)
    var = jnp.maximum(jnp.mean(feats * feats, axis=-1, keepdims=True) - mu * mu, 0.0)
    feats_n = (feats - mu) * lax.rsqrt(var + LN_EPS) * gamma + beta      # [Bt, N, D]

    # ---- CoordNorm(S, norm='length', zero_com=True) ----
    mask_c = mask[:, :, None, :]                                         # [Bt, S, 1, N]
    n_atoms = jnp.maximum(jnp.sum(mask, axis=-1, keepdims=True), 1.0)    # [Bt, S, 1]
    com = jnp.sum(coords * mask_c, axis=-1, keepdims=True) / n_atoms[..., None]
    coords_c = (coords - com) * mask_c                                   # [Bt, S, 3, N]
    sq = coords_c * coords_c
    lengths = jnp.sqrt(sq[:, :, 0, :] + sq[:, :, 1, :] + sq[:, :, 2, :])  # [Bt, S, N]
    scaled_len = jnp.sum(lengths, axis=-1, keepdims=True) / n_atoms      # [Bt, S, 1]
    inv_div = 1.0 / (scaled_len + CN_EPS)                                # [Bt, S, 1]
    coords_n = coords_c * (set_w[None, :, None, None] * inv_div[..., None])   # [Bt, S, 3, N]
    # ||coords_n|| computed algebraically (coords_c already masked/zeroed).
    lengths_n = lengths * (jnp.abs(set_w)[None, :, None] * inv_div)      # [Bt, S, N]

    # ---- Fused first matmul over the LayerNorm'd features ----
    # columns [0, d_ff)   -> LengthsMLP W1 (node-feature block)
    # columns [d_ff, +P)  -> EquivariantMLP node_proj W1
    M = Bt * N
    feats2d = feats_n.reshape(M, D)                                      # [M, D]
    hp = jnp.dot(feats2d, wfused_ref[...], preferred_element_type=jnp.float32)
    hp = hp + bfused_ref[...]                                            # [M, d_ff+P]

    # ---- LengthsMLP (concat realised as split weight blocks) ----
    len2d = jnp.transpose(lengths_n, (0, 2, 1)).reshape(M, S)            # [M, S] (tiny)
    h = hp[:, :d_ff] + jnp.dot(len2d, w1l_ref[...], preferred_element_type=jnp.float32)
    h = h * jax.nn.sigmoid(h)                                            # SiLU
    node_out = jnp.dot(h, w2_ref[...], preferred_element_type=jnp.float32) + b2
    nodef_out_ref[...] = node_out.reshape(Bt, N, D).astype(nodef_out_ref.dtype)

    # ---- EquivariantMLP (rank-1 form, wp2@wa precomposed) ----
    p = hp[:, d_ff:]
    p = p * jax.nn.sigmoid(p)                                            # SiLU
    attn = jnp.dot(p, wpa_ref[...], preferred_element_type=jnp.float32) + bpa   # [M, S]
    attn = jnp.transpose(attn.reshape(Bt, N, S), (0, 2, 1))              # [Bt, S, N]
    s_proj = jnp.sum(coords_n * wc_colsum[None, :, None, None], axis=1)  # [Bt, 3, N]
    coords_out = attn[:, :, None, :] * s_proj[:, None, :, :]             # [Bt, S, 3, N]
    coords_out_ref[...] = coords_out.astype(coords_out_ref.dtype)


def _choose_block_b(B, S, N, D, d_ff, P, itemsize=4, vmem_budget=20 << 20):
    """Pick block_b: biggest M=block_b*N (target >=256) within a VMEM budget,
    keeping >=2 grid steps when possible so both v7x TensorCores get work."""
    def est_bytes(bb):
        io = bb * (2 * S * 3 * N + 2 * N * D + S * N) * itemsize * 2        # in+out, dbl-buffered
        act = bb * N * (2 * (d_ff + P) + 2 * D + 8 * S + 12) * itemsize     # activations
        wts = (D * (d_ff + P) + S * d_ff + d_ff * D + P * S + 3 * D + 3 * S) * itemsize * 2
        return io + act + wts

    best = 1
    for bb in range(1, B + 1):
        if B % bb != 0:
            continue
        if B >= 2 and B // bb < 2:      # keep the "parallel" batch axis >= 2 steps
            continue
        if est_bytes(bb) > vmem_budget:
            continue
        best = bb
        if bb * N >= 256:               # MXU M dimension large enough
            break
    return best


def init_params(key, d_model, n_coord_sets, d_ff, proj_sets):
    """Deterministic synthetic parameters matching the module's __init__ shapes."""
    S, P = n_coord_sets, proj_sets
    in_ff = d_model + S
    ks = jax.random.split(key, 9)

    def lin(k, fan_in, fan_out, bias=True):
        bound = 1.0 / np.sqrt(fan_in)
        kw, kb = jax.random.split(k)
        w = jax.random.uniform(kw, (fan_in, fan_out), jnp.float32, -bound, bound)
        if not bias:
            return w
        b = jax.random.uniform(kb, (fan_out,), jnp.float32, -bound, bound)
        return w, b

    w1, b1 = lin(ks[0], in_ff, d_ff)      # concat order: [node_feats | lengths]
    w2, b2 = lin(ks[1], d_ff, d_model)
    wp1, bp1 = lin(ks[2], d_model, P)
    wp2, bp2 = lin(ks[3], P, P)
    wc = lin(ks[4], S, P, bias=False)     # coord_proj (no bias)
    wa = lin(ks[5], P, S, bias=False)     # attn_proj  (no bias)
    ln_g = 1.0 + 0.1 * jax.random.normal(ks[6], (d_model,), jnp.float32)
    ln_b = 0.1 * jax.random.normal(ks[7], (d_model,), jnp.float32)
    set_w = 1.0 + 0.1 * jax.random.normal(ks[8], (S,), jnp.float32)
    return dict(ln_g=ln_g, ln_b=ln_b, set_w=set_w,
                w1=w1, b1=b1, w2=w2, b2=b2,
                wp1=wp1, bp1=bp1, wp2=wp2, bp2=bp2, wc=wc, wa=wa)


def node_feed_forward(coords, node_feats, node_mask, params, *, block_b=None):
    B, S, N, _ = coords.shape
    D = node_feats.shape[-1]
    d_ff = params["w1"].shape[1]
    P = params["wp1"].shape[1]

    if block_b is None:
        block_b = _choose_block_b(B, S, N, D, d_ff, P)
    assert B % block_b == 0, "block_b must divide the batch size"

    # N-minor coords layout for the kernel (lane-dense loads/stores).
    coords_t = jnp.transpose(coords, (0, 1, 3, 2))                       # [B, S, 3, N]
    mask_f = node_mask.astype(coords.dtype)                              # [B, S, N]

    # --- parameter packing (all done once, outside the kernel) ---
    w1n = params["w1"][:D]                                               # [D, d_ff]
    w1l = params["w1"][D:]                                               # [S, d_ff]
    wfused = jnp.concatenate([w1n, params["wp1"]], axis=1)               # [D, d_ff+P]
    bfused = jnp.concatenate([params["b1"], params["bp1"]])[None, :]     # [1, d_ff+P]
    wpa = jnp.dot(params["wp2"], params["wa"])                           # [P, S]
    bpa = jnp.dot(params["bp2"], params["wa"])                           # [S]
    nodevec = jnp.stack([params["ln_g"], params["ln_b"], params["b2"]])  # [3, D]
    svec = jnp.stack([params["set_w"], jnp.sum(params["wc"], axis=1), bpa])   # [3, S]

    grid = (B // block_b,)

    def batched(shape):
        return pl.BlockSpec(shape, lambda b, _n=len(shape) - 1: (b,) + (0,) * _n)

    def full(arr):
        return pl.BlockSpec(arr.shape, lambda b, _nd=arr.ndim: (0,) * _nd)

    in_specs = [
        batched((block_b, S, 3, N)),
        batched((block_b, N, D)),
        batched((block_b, S, N)),
        full(nodevec), full(wfused), full(bfused), full(w1l), full(params["w2"]),
        full(wpa), full(svec),
    ]
    out_specs = (
        pl.BlockSpec((block_b, S, 3, N), lambda b: (b, 0, 0, 0)),
        pl.BlockSpec((block_b, N, D), lambda b: (b, 0, 0)),
    )
    out_shape = (
        jax.ShapeDtypeStruct((B, S, 3, N), coords.dtype),
        jax.ShapeDtypeStruct((B, N, D), node_feats.dtype),
    )

    coords_out_t, nodes_out = pl.pallas_call(
        node_ff_kernel,
        out_shape=out_shape,
        grid_spec=pltpu.PrefetchScalarGridSpec(
            num_scalar_prefetch=0,
            grid=grid,
            in_specs=in_specs,
            out_specs=out_specs,
        ),
        compiler_params=pltpu.CompilerParams(
            dimension_semantics=("parallel",),           # batch steps independent
            vmem_limit_bytes=32 * 1024 * 1024,           # safe on v5e/v6e/v7x
        ),
    )(coords_t, node_feats, mask_f,
      nodevec, wfused, bfused, w1l, params["w2"], wpa, svec)

    coords_out = jnp.transpose(coords_out_t, (0, 1, 3, 2))               # [B, S, N, 3]
    return coords_out, nodes_out


def node_feed_forward_ref(coords, node_feats, node_mask, params):
    """Pure-JAX reference, written to mirror the PyTorch forward literally."""
    mask = node_mask.astype(coords.dtype)                     # [B, S, N]

    # node_norm
    mu = node_feats.mean(-1, keepdims=True)
    var = ((node_feats - mu) ** 2).mean(-1, keepdims=True)
    nf = (node_feats - mu) / jnp.sqrt(var + LN_EPS) * params["ln_g"] + params["ln_b"]

    # CoordNorm('length', zero_com=True)
    m4 = mask[..., None]
    n_atoms = mask.sum(-1, keepdims=True)                     # [B, S, 1]
    com = (coords * m4).sum(2, keepdims=True) / n_atoms[..., None]
    c = (coords - com) * m4
    lengths = jnp.linalg.norm(c, axis=-1)                     # [B, S, N]
    scaled = lengths.sum(-1, keepdims=True) / n_atoms         # [B, S, 1]
    div = scaled[..., None] + CN_EPS
    c = c * params["set_w"][None, :, None, None] / div
    c = c * m4

    # LengthsMLP
    l2 = jnp.linalg.norm(c, axis=-1)                          # [B, S, N]
    in_feats = jnp.concatenate([nf, jnp.moveaxis(l2, 1, -1)], axis=-1)
    h = in_feats @ params["w1"] + params["b1"]
    h = h * jax.nn.sigmoid(h)
    node_out = h @ params["w2"] + params["b2"]

    # EquivariantMLP (literal PxP outer-product form)
    p = nf @ params["wp1"] + params["bp1"]
    p = p * jax.nn.sigmoid(p)
    inv = p @ params["wp2"] + params["bp2"]                   # [B, N, P]
    inv = inv[:, None]                                        # [B, 1, N, P]
    coordsT = jnp.swapaxes(c, 1, -1)                          # [B, 3, N, S]
    proj = coordsT @ params["wc"]                             # [B, 3, N, P]
    attn = (inv[..., None] * proj[..., None, :]).sum(-1)      # [B, 3, N, P]
    y = attn @ params["wa"]                                   # [B, 3, N, S]
    coords_out = jnp.swapaxes(y, 1, -1)                       # [B, S, N, 3]
    return coords_out, node_out


if __name__ == "__main__":
    B, S, N = 2, 4, 16                     # batch, n_coord_sets, n_nodes
    d_model, d_ff, proj_sets = 32, 64, 4

    key = jax.random.PRNGKey(0)
    kp, kc, kn = jax.random.split(key, 3)
    params = init_params(kp, d_model, S, d_ff, proj_sets)

    coords = jax.random.normal(kc, (B, S, N, 3), jnp.float32)
    node_feats = jax.random.normal(kn, (B, N, d_model), jnp.float32)
    lens = jnp.array([16, 12])
    node_mask = (jnp.arange(N)[None, None, :] < lens[:, None, None]).astype(jnp.float32)
    node_mask = jnp.broadcast_to(node_mask, (B, S, N))        # [B, S, N]

    coords_out, nodes_out = jax.jit(node_feed_forward)(coords, node_feats, node_mask, params)
    coords_out = jax.block_until_ready(coords_out)
    nodes_out = jax.block_until_ready(nodes_out)

    ref_coords, ref_nodes = node_feed_forward_ref(coords, node_feats, node_mask, params)
    # Tolerance bounded by TPU default-precision (bf16-input) MXU matmuls, which
    # truncate at different points in the refactored kernel vs the literal
    # reference; all non-matmul math is exact f32.
    ok = (np.allclose(np.asarray(coords_out), np.asarray(ref_coords), atol=1e-2, rtol=1e-2)
          and np.allclose(np.asarray(nodes_out), np.asarray(ref_nodes), atol=1e-2, rtol=1e-2))
    if not ok:
        raise AssertionError("Pallas kernel output does not match reference")

    print("KERNEL_OK")
</pallas_src>

<mosaic_0001>
module attributes {stable_mosaic.version = 11 : i64} {
  func.func @node_ff_kernel(%arg0: i32, %arg1: memref<1x4x3x16xf32, #tpu.memory_space<vmem>>, %arg2: memref<1x16x32xf32, #tpu.memory_space<vmem>>, %arg3: memref<1x4x16xf32, #tpu.memory_space<vmem>>, %arg4: memref<3x32xf32, #tpu.memory_space<vmem>>, %arg5: memref<32x68xf32, #tpu.memory_space<vmem>>, %arg6: memref<1x68xf32, #tpu.memory_space<vmem>>, %arg7: memref<4x64xf32, #tpu.memory_space<vmem>>, %arg8: memref<64x32xf32, #tpu.memory_space<vmem>>, %arg9: memref<4x4xf32, #tpu.memory_space<vmem>>, %arg10: memref<3x4xf32, #tpu.memory_space<vmem>>, %arg11: memref<1x4x3x16xf32, #tpu.memory_space<vmem>>, %arg12: memref<1x16x32xf32, #tpu.memory_space<vmem>>) attributes {dimension_semantics = [#tpu.dimension_semantics<parallel>], iteration_bounds = array<i64: 2>, scalar_prefetch = 0 : i64, scratch_operands = 0 : i64, tpu.core_type = #tpu.core_type<tc>, window_params = [{transform_indices = @transform_0, window_bounds = array<i64: 1, 4, 3, 16>}, {transform_indices = @transform_1, window_bounds = array<i64: 1, 16, 32>}, {transform_indices = @transform_2, window_bounds = array<i64: 1, 4, 16>}, {pipeline_mode = #tpu.pipeline_mode<synchronous>, transform_indices = @transform_3, window_bounds = array<i64: 3, 32>}, {pipeline_mode = #tpu.pipeline_mode<synchronous>, transform_indices = @transform_4, window_bounds = array<i64: 32, 68>}, {pipeline_mode = #tpu.pipeline_mode<synchronous>, transform_indices = @transform_5, window_bounds = array<i64: 1, 68>}, {pipeline_mode = #tpu.pipeline_mode<synchronous>, transform_indices = @transform_6, window_bounds = array<i64: 4, 64>}, {pipeline_mode = #tpu.pipeline_mode<synchronous>, transform_indices = @transform_7, window_bounds = array<i64: 64, 32>}, {pipeline_mode = #tpu.pipeline_mode<synchronous>, transform_indices = @transform_8, window_bounds = array<i64: 4, 4>}, {pipeline_mode = #tpu.pipeline_mode<synchronous>, transform_indices = @transform_9, window_bounds = array<i64: 3, 4>}, {transform_indices = @transform_10, window_bounds = array<i64: 1, 4, 3, 16>}, {transform_indices = @transform_11, window_bounds = array<i64: 1, 16, 32>}]} {
    %c0 = arith.constant 0 : index
    %c0_0 = arith.constant 0 : index
    %c0_1 = arith.constant 0 : index
    %c0_2 = arith.constant 0 : index
    %0 = vector.load %arg1[%c0, %c0_0, %c0_1, %c0_2] : memref<1x4x3x16xf32, #tpu.memory_space<vmem>>, vector<1x4x3x16xf32>
    %c0_3 = arith.constant 0 : index
    %c0_4 = arith.constant 0 : index
    %c0_5 = arith.constant 0 : index
    %1 = vector.load %arg2[%c0_3, %c0_4, %c0_5] : memref<1x16x32xf32, #tpu.memory_space<vmem>>, vector<1x16x32xf32>
    %c0_6 = arith.constant 0 : index
    %c0_7 = arith.constant 0 : index
    %c0_8 = arith.constant 0 : index
    %2 = vector.load %arg3[%c0_6, %c0_7, %c0_8] : memref<1x4x16xf32, #tpu.memory_space<vmem>>, vector<1x4x16xf32>
    %c0_9 = arith.constant 0 : index
    %c0_10 = arith.constant 0 : index
    %3 = vector.load %arg4[%c0_9, %c0_10] : memref<3x32xf32, #tpu.memory_space<vmem>>, vector<1x32xf32>
    %4 = vector.shape_cast %3 : vector<1x32xf32> to vector<32xf32>
    %c1 = arith.constant 1 : index
    %c0_11 = arith.constant 0 : index
    %5 = vector.load %arg4[%c1, %c0_11] : memref<3x32xf32, #tpu.memory_space<vmem>>, vector<1x32xf32>
    %6 = vector.shape_cast %5 : vector<1x32xf32> to vector<32xf32>
    %c2 = arith.constant 2 : index
    %c0_12 = arith.constant 0 : index
    %7 = vector.load %arg4[%c2, %c0_12] : memref<3x32xf32, #tpu.memory_space<vmem>>, vector<1x32xf32>
    %8 = vector.shape_cast %7 : vector<1x32xf32> to vector<32xf32>
    %c0_13 = arith.constant 0 : index
    %c0_14 = arith.constant 0 : index
    %9 = vector.load %arg10[%c0_13, %c0_14] : memref<3x4xf32, #tpu.memory_space<vmem>>, vector<1x4xf32>
    %10 = vector.shape_cast %9 : vector<1x4xf32> to vector<4xf32>
    %c1_15 = arith.constant 1 : index
    %c0_16 = arith.constant 0 : index
    %11 = vector.load %arg10[%c1_15, %c0_16] : memref<3x4xf32, #tpu.memory_space<vmem>>, vector<1x4xf32>
    %12 = vector.shape_cast %11 : vector<1x4xf32> to vector<4xf32>
    %c2_17 = arith.constant 2 : index
    %c0_18 = arith.constant 0 : index
    %13 = vector.load %arg10[%c2_17, %c0_18] : memref<3x4xf32, #tpu.memory_space<vmem>>, vector<1x4xf32>
    %14 = vector.shape_cast %13 : vector<1x4xf32> to vector<4xf32>
    %cst = arith.constant dense<0.000000e+00> : vector<1x16xf32>
    %15 = vector.multi_reduction <add>, %1, %cst [2] : vector<1x16x32xf32> to vector<1x16xf32>
    %16 = vector.shape_cast %15 : vector<1x16xf32> to vector<1x16x1xf32>
    %cst_19 = arith.constant 3.200000e+01 : f32
    %17 = vector.broadcast %cst_19 : f32 to vector<1x16x1xf32>
    %18 = arith.divf %16, %17 : vector<1x16x1xf32>
    %19 = arith.mulf %1, %1 : vector<1x16x32xf32>
    %cst_20 = arith.constant dense<0.000000e+00> : vector<1x16xf32>
    %20 = vector.multi_reduction <add>, %19, %cst_20 [2] : vector<1x16x32xf32> to vector<1x16xf32>
    %21 = vector.shape_cast %20 : vector<1x16xf32> to vector<1x16x1xf32>
    %cst_21 = arith.constant 3.200000e+01 : f32
    %22 = vector.broadcast %cst_21 : f32 to vector<1x16x1xf32>
    %23 = arith.divf %21, %22 : vector<1x16x1xf32>
    %24 = arith.mulf %18, %18 : vector<1x16x1xf32>
    %25 = arith.subf %23, %24 : vector<1x16x1xf32>
    %cst_22 = arith.constant 0.000000e+00 : f32
    %26 = vector.broadcast %cst_22 : f32 to vector<1x16x1xf32>
    %27 = arith.maximumf %25, %26 : vector<1x16x1xf32>
    %28 = vector.broadcast %18 : vector<1x16x1xf32> to vector<1x16x32xf32>
    %29 = arith.subf %1, %28 : vector<1x16x32xf32>
    %cst_23 = arith.constant 9.99999974E-6 : f32
    %30 = vector.broadcast %cst_23 : f32 to vector<1x16x1xf32>
    %31 = arith.addf %27, %30 : vector<1x16x1xf32>
    %32 = math.rsqrt %31 : vector<1x16x1xf32>
    %33 = vector.broadcast %32 : vector<1x16x1xf32> to vector<1x16x32xf32>
    %34 = arith.mulf %29, %33 : vector<1x16x32xf32>
    %35 = vector.shape_cast %4 : vector<32xf32> to vector<1x1x32xf32>
    %36 = vector.broadcast %35 : vector<1x1x32xf32> to vector<1x16x32xf32>
    %37 = arith.mulf %34, %36 : vector<1x16x32xf32>
    %38 = vector.shape_cast %6 : vector<32xf32> to vector<1x1x32xf32>
    %39 = vector.broadcast %38 : vector<1x1x32xf32> to vector<1x16x32xf32>
    %40 = arith.addf %37, %39 : vector<1x16x32xf32>
    %41 = vector.shape_cast %2 : vector<1x4x16xf32> to vector<1x4x1x16xf32>
    %cst_24 = arith.constant dense<0.000000e+00> : vector<1x4xf32>
    %42 = vector.multi_reduction <add>, %2, %cst_24 [2] : vector<1x4x16xf32> to vector<1x4xf32>
    %43 = vector.shape_cast %42 : vector<1x4xf32> to vector<1x4x1xf32>
    %cst_25 = arith.constant 1.000000e+00 : f32
    %44 = vector.broadcast %cst_25 : f32 to vector<1x4x1xf32>
    %45 = arith.maximumf %43, %44 : vector<1x4x1xf32>
    %46 = vector.broadcast %41 : vector<1x4x1x16xf32> to vector<1x4x3x16xf32>
    %47 = arith.mulf %0, %46 : vector<1x4x3x16xf32>
    %cst_26 = arith.constant dense<0.000000e+00> : vector<1x4x3xf32>
    %48 = vector.multi_reduction <add>, %47, %cst_26 [3] : vector<1x4x3x16xf32> to vector<1x4x3xf32>
    %49 = vector.shape_cast %48 : vector<1x4x3xf32> to vector<1x4x3x1xf32>
    %50 = vector.shape_cast %45 : vector<1x4x1xf32> to vector<1x4x1x1xf32>
    %51 = vector.broadcast %50 : vector<1x4x1x1xf32> to vector<1x4x3x1xf32>
    %52 = arith.divf %49, %51 : vector<1x4x3x1xf32>
    %53 = vector.broadcast %52 : vector<1x4x3x1xf32> to vector<1x4x3x16xf32>
    %54 = arith.subf %0, %53 : vector<1x4x3x16xf32>
    %55 = vector.broadcast %41 : vector<1x4x1x16xf32> to vector<1x4x3x16xf32>
    %56 = arith.mulf %54, %55 : vector<1x4x3x16xf32>
    %57 = arith.mulf %56, %56 : vector<1x4x3x16xf32>
    %58 = vector.extract_strided_slice %57 {offsets = [0, 0, 0, 0], sizes = [1, 4, 1, 16], strides = [1, 1, 1, 1]} : vector<1x4x3x16xf32> to vector<1x4x1x16xf32>
    %59 = vector.shape_cast %58 : vector<1x4x1x16xf32> to vector<1x4x16xf32>
    %60 = vector.extract_strided_slice %57 {offsets = [0, 0, 1, 0], sizes = [1, 4, 1, 16], strides = [1, 1, 1, 1]} : vector<1x4x3x16xf32> to vector<1x4x1x16xf32>
    %61 = vector.shape_cast %60 : vector<1x4x1x16xf32> to vector<1x4x16xf32>
    %62 = arith.addf %59, %61 : vector<1x4x16xf32>
    %63 = vector.extract_strided_slice %57 {offsets = [0, 0, 2, 0], sizes = [1, 4, 1, 16], strides = [1, 1, 1, 1]} : vector<1x4x3x16xf32> to vector<1x4x1x16xf32>
    %64 = vector.shape_cast %63 : vector<1x4x1x16xf32> to vector<1x4x16xf32>
    %65 = arith.addf %62, %64 : vector<1x4x16xf32>
    %66 = math.sqrt %65 : vector<1x4x16xf32>
    %cst_27 = arith.constant dense<0.000000e+00> : vector<1x4xf32>
    %67 = vector.multi_reduction <add>, %66, %cst_27 [2] : vector<1x4x16xf32> to vector<1x4xf32>
    %68 = vector.shape_cast %67 : vector<1x4xf32> to vector<1x4x1xf32>
    %69 = arith.divf %68, %45 : vector<1x4x1xf32>
    %cst_28 = arith.constant 9.99999997E-7 : f32
    %70 = vector.broadcast %cst_28 : f32 to vector<1x4x1xf32>
    %71 = arith.addf %69, %70 : vector<1x4x1xf32>
    %cst_29 = arith.constant 1.000000e+00 : f32
    %72 = vector.broadcast %cst_29 : f32 to vector<1x4x1xf32>
    %73 = arith.divf %72, %71 : vector<1x4x1xf32>
    %74 = vector.shape_cast %10 : vector<4xf32> to vector<1x4x1x1xf32>
    %75 = vector.shape_cast %73 : vector<1x4x1xf32> to vector<1x4x1x1xf32>
    %76 = arith.mulf %74, %75 : vector<1x4x1x1xf32>
    %77 = vector.broadcast %76 : vector<1x4x1x1xf32> to vector<1x4x3x16xf32>
    %78 = arith.mulf %56, %77 : vector<1x4x3x16xf32>
    %79 = math.absf %10 : vector<4xf32>
    %80 = vector.shape_cast %79 : vector<4xf32> to vector<1x4x1xf32>
    %81 = arith.mulf %80, %73 : vector<1x4x1xf32>
    %82 = vector.broadcast %81 : vector<1x4x1xf32> to vector<1x4x16xf32>
    %83 = arith.mulf %66, %82 : vector<1x4x16xf32>
    %84 = vector.shape_cast %40 : vector<1x16x32xf32> to vector<16x32xf32>
    %c0_30 = arith.constant 0 : index
    %c0_31 = arith.constant 0 : index
    %85 = vector.load %arg5[%c0_30, %c0_31] : memref<32x68xf32, #tpu.memory_space<vmem>>, vector<32x68xf32>
    %cst_32 = arith.constant dense<0.000000e+00> : vector<16x68xf32>
    %86 = tpu.matmul %84, %85, %cst_32 {dimension_numbers = #tpu.dot_dimension_numbers<[1], [0], [0], [1], [0, 0, 1, 1], [], []>} : vector<16x32xf32>, vector<32x68xf32>, vector<16x68xf32> -> vector<16x68xf32>
    %c0_33 = arith.constant 0 : index
    %c0_34 = arith.constant 0 : index
    %87 = vector.load %arg6[%c0_33, %c0_34] : memref<1x68xf32, #tpu.memory_space<vmem>>, vector<1x68xf32>
    %88 = vector.broadcast %87 : vector<1x68xf32> to vector<16x68xf32>
    %89 = arith.addf %86, %88 : vector<16x68xf32>
    %90 = tpu.transpose %83, [0, 2, 1] : vector<1x4x16xf32> -> vector<1x16x4xf32>
    %91 = vector.shape_cast %90 : vector<1x16x4xf32> to vector<16x4xf32>
    %92 = vector.extract_strided_slice %89 {offsets = [0, 0], sizes = [16, 64], strides = [1, 1]} : vector<16x68xf32> to vector<16x64xf32>
    %c0_35 = arith.constant 0 : index
    %c0_36 = arith.constant 0 : index
    %93 = vector.load %arg7[%c0_35, %c0_36] : memref<4x64xf32, #tpu.memory_space<vmem>>, vector<4x64xf32>
    %cst_37 = arith.constant dense<0.000000e+00> : vector<16x64xf32>
    %94 = tpu.matmul %91, %93, %cst_37 {dimension_numbers = #tpu.dot_dimension_numbers<[1], [0], [0], [1], [0, 0, 1, 1], [], []>} : vector<16x4xf32>, vector<4x64xf32>, vector<16x64xf32> -> vector<16x64xf32>
    %95 = arith.addf %92, %94 : vector<16x64xf32>
    %96 = arith.negf %95 : vector<16x64xf32>
    %97 = math.exp %96 : vector<16x64xf32>
    %cst_38 = arith.constant 1.000000e+00 : f32
    %98 = vector.broadcast %cst_38 : f32 to vector<16x64xf32>
    %99 = arith.addf %98, %97 : vector<16x64xf32>
    %100 = arith.divf %98, %99 : vector<16x64xf32>
    %101 = arith.mulf %95, %100 : vector<16x64xf32>
    %c0_39 = arith.constant 0 : index
    %c0_40 = arith.constant 0 : index
    %102 = vector.load %arg8[%c0_39, %c0_40] : memref<64x32xf32, #tpu.memory_space<vmem>>, vector<64x32xf32>
    %cst_41 = arith.constant dense<0.000000e+00> : vector<16x32xf32>
    %103 = tpu.matmul %101, %102, %cst_41 {dimension_numbers = #tpu.dot_dimension_numbers<[1], [0], [0], [1], [0, 0, 1, 1], [], []>} : vector<16x64xf32>, vector<64x32xf32>, vector<16x32xf32> -> vector<16x32xf32>
    %104 = vector.shape_cast %8 : vector<32xf32> to vector<1x32xf32>
    %105 = vector.broadcast %104 : vector<1x32xf32> to vector<16x32xf32>
    %106 = arith.addf %103, %105 : vector<16x32xf32>
    %107 = vector.shape_cast %106 : vector<16x32xf32> to vector<1x16x32xf32>
    %c0_42 = arith.constant 0 : index
    %c0_43 = arith.constant 0 : index
    %c0_44 = arith.constant 0 : index
    %108 = vector.load %arg12[%c0_42, %c0_43, %c0_44] : memref<1x16x32xf32, #tpu.memory_space<vmem>>, vector<1x16x32xf32>
    tpu.vector_store %arg12[%c0_42, %c0_43, %c0_44], %107 {strides = array<i32>} : memref<1x16x32xf32, #tpu.memory_space<vmem>>, vector<1x16x32xf32>,
    %109 = vector.extract_strided_slice %89 {offsets = [0, 64], sizes = [16, 4], strides = [1, 1]} : vector<16x68xf32> to vector<16x4xf32>
    %110 = arith.negf %109 : vector<16x4xf32>
    %111 = math.exp %110 : vector<16x4xf32>
    %cst_45 = arith.constant 1.000000e+00 : f32
    %112 = vector.broadcast %cst_45 : f32 to vector<16x4xf32>
    %113 = arith.addf %112, %111 : vector<16x4xf32>
    %114 = arith.divf %112, %113 : vector<16x4xf32>
    %115 = arith.mulf %109, %114 : vector<16x4xf32>
    %c0_46 = arith.constant 0 : index
    %c0_47 = arith.constant 0 : index
    %116 = vector.load %arg9[%c0_46, %c0_47] : memref<4x4xf32, #tpu.memory_space<vmem>>, vector<4x4xf32>
    %cst_48 = arith.constant dense<0.000000e+00> : vector<16x4xf32>
    %117 = tpu.matmul %115, %116, %cst_48 {dimension_numbers = #tpu.dot_dimension_numbers<[1], [0], [0], [1], [0, 0, 1, 1], [], []>} : vector<16x4xf32>, vector<4x4xf32>, vector<16x4xf32> -> vector<16x4xf32>
    %118 = vector.shape_cast %14 : vector<4xf32> to vector<1x4xf32>
    %119 = vector.broadcast %118 : vector<1x4xf32> to vector<16x4xf32>
    %120 = arith.addf %117, %119 : vector<16x4xf32>
    %121 = vector.shape_cast %120 : vector<16x4xf32> to vector<1x16x4xf32>
    %122 = tpu.transpose %121, [0, 2, 1] : vector<1x16x4xf32> -> vector<1x4x16xf32>
    %123 = vector.shape_cast %12 : vector<4xf32> to vector<1x4x1x1xf32>
    %124 = vector.broadcast %123 : vector<1x4x1x1xf32> to vector<1x4x3x16xf32>
    %125 = arith.mulf %78, %124 : vector<1x4x3x16xf32>
    %cst_49 = arith.constant dense<0.000000e+00> : vector<1x3x16xf32>
    %126 = vector.multi_reduction <add>, %125, %cst_49 [1] : vector<1x4x3x16xf32> to vector<1x3x16xf32>
    %127 = vector.shape_cast %122 : vector<1x4x16xf32> to vector<1x4x1x16xf32>
    %128 = vector.shape_cast %126 : vector<1x3x16xf32> to vector<1x1x3x16xf32>
    %129 = vector.broadcast %127 : vector<1x4x1x16xf32> to vector<1x4x3x16xf32>
    %130 = vector.broadcast %128 : vector<1x1x3x16xf32> to vector<1x4x3x16xf32>
    %131 = arith.mulf %129, %130 : vector<1x4x3x16xf32>
    %c0_50 = arith.constant 0 : index
    %c0_51 = arith.constant 0 : index
    %c0_52 = arith.constant 0 : index
    %c0_53 = arith.constant 0 : index
    %132 = vector.load %arg11[%c0_50, %c0_51, %c0_52, %c0_53] : memref<1x4x3x16xf32, #tpu.memory_space<vmem>>, vector<1x4x3x16xf32>
    tpu.vector_store %arg11[%c0_50, %c0_51, %c0_52, %c0_53], %131 {strides = array<i32>} : memref<1x4x3x16xf32, #tpu.memory_space<vmem>>, vector<1x4x3x16xf32>,
    return
  }
  func.func @transform_0(%arg0: i32) -> (i32, i32, i32, i32) {
    %c0_i32 = arith.constant 0 : i32
    %c0_i32_0 = arith.constant 0 : i32
    %c0_i32_1 = arith.constant 0 : i32
    %c0_i32_2 = arith.constant 0 : i32
    return %arg0, %c0_i32, %c0_i32_0, %c0_i32_1 : i32, i32, i32, i32
  }
  func.func @transform_1(%arg0: i32) -> (i32, i32, i32) {
    %c0_i32 = arith.constant 0 : i32
    %c0_i32_0 = arith.constant 0 : i32
    %c0_i32_1 = arith.constant 0 : i32
    return %arg0, %c0_i32, %c0_i32_0 : i32, i32, i32
  }
  func.func @transform_2(%arg0: i32) -> (i32, i32, i32) {
    %c0_i32 = arith.constant 0 : i32
    %c0_i32_0 = arith.constant 0 : i32
    %c0_i32_1 = arith.constant 0 : i32
    return %arg0, %c0_i32, %c0_i32_0 : i32, i32, i32
  }
  func.func @transform_3(%arg0: i32) -> (i32, i32) {
    %c0_i32 = arith.constant 0 : i32
    %c0_i32_0 = arith.constant 0 : i32
    %c0_i32_1 = arith.constant 0 : i32
    return %c0_i32, %c0_i32_0 : i32, i32
  }
  func.func @transform_4(%arg0: i32) -> (i32, i32) {
    %c0_i32 = arith.constant 0 : i32
    %c0_i32_0 = arith.constant 0 : i32
    %c0_i32_1 = arith.constant 0 : i32
    return %c0_i32, %c0_i32_0 : i32, i32
  }
  func.func @transform_5(%arg0: i32) -> (i32, i32) {
    %c0_i32 = arith.constant 0 : i32
    %c0_i32_0 = arith.constant 0 : i32
    %c0_i32_1 = arith.constant 0 : i32
    return %c0_i32, %c0_i32_0 : i32, i32
  }
  func.func @transform_6(%arg0: i32) -> (i32, i32) {
    %c0_i32 = arith.constant 0 : i32
    %c0_i32_0 = arith.constant 0 : i32
    %c0_i32_1 = arith.constant 0 : i32
    return %c0_i32, %c0_i32_0 : i32, i32
  }
  func.func @transform_7(%arg0: i32) -> (i32, i32) {
    %c0_i32 = arith.constant 0 : i32
    %c0_i32_0 = arith.constant 0 : i32
    %c0_i32_1 = arith.constant 0 : i32
    return %c0_i32, %c0_i32_0 : i32, i32
  }
  func.func @transform_8(%arg0: i32) -> (i32, i32) {
    %c0_i32 = arith.constant 0 : i32
    %c0_i32_0 = arith.constant 0 : i32
    %c0_i32_1 = arith.constant 0 : i32
    return %c0_i32, %c0_i32_0 : i32, i32
  }
  func.func @transform_9(%arg0: i32) -> (i32, i32) {
    %c0_i32 = arith.constant 0 : i32
    %c0_i32_0 = arith.constant 0 : i32
    %c0_i32_1 = arith.constant 0 : i32
    return %c0_i32, %c0_i32_0 : i32, i32
  }
  func.func @transform_10(%arg0: i32) -> (i32, i32, i32, i32) {
    %c0_i32 = arith.constant 0 : i32
    %c0_i32_0 = arith.constant 0 : i32
    %c0_i32_1 = arith.constant 0 : i32
    %c0_i32_2 = arith.constant 0 : i32
    return %arg0, %c0_i32, %c0_i32_0, %c0_i32_1 : i32, i32, i32, i32
  }
  func.func @transform_11(%arg0: i32) -> (i32, i32, i32) {
    %c0_i32 = arith.constant 0 : i32
    %c0_i32_0 = arith.constant 0 : i32
    %c0_i32_1 = arith.constant 0 : i32
    return %arg0, %c0_i32, %c0_i32_0 : i32, i32, i32
  }
}

</mosaic_0001>

<llo_original>
// kernel: node_feed_forward.1
$region0: #{node_feed_forward.1}
  #allocation0 [shape = 'u32[]', space=smem, size = 0x4, offset = 0x4, fixed_abs, tag = 'smem constant byte address 0x4 - core index']
  #allocation1 [shape = 'u32[144,128]{1,0:T(1,128)}', space=vmem, size = 0x12000, scoped, tag = 'internal scratch']
  %s0 = inlined_call_operand.vmem [shape: f32[2,4,3,16], index: 0, kind: input, shape index: {}]
  %s1 = inlined_call_operand.vmem [shape: f32[2,16,32], index: 1, kind: input, shape index: {}]
  %s2 = inlined_call_operand.vmem [shape: f32[2,4,16], index: 2, kind: input, shape index: {}]
  %s3 = inlined_call_operand.vmem [shape: f32[3,32], index: 3, kind: input, shape index: {}]
  %s4 = inlined_call_operand.vmem [shape: f32[32,68], index: 4, kind: input, shape index: {}]
  %s5 = inlined_call_operand.vmem [shape: f32[1,68], index: 5, kind: input, shape index: {}]
  %s6 = inlined_call_operand.vmem [shape: f32[4,64], index: 6, kind: input, shape index: {}]
  %s7 = inlined_call_operand.vmem [shape: f32[64,32], index: 7, kind: input, shape index: {}]
  %s8 = inlined_call_operand.vmem [shape: f32[4,4], index: 8, kind: input, shape index: {}]
  %s9 = inlined_call_operand.vmem [shape: f32[3,4], index: 9, kind: input, shape index: {}]
  %s10 = inlined_call_operand.vmem [shape: f32[2,4,3,16], index: 10, kind: output, shape index: {0}]
  %s11 = inlined_call_operand.hbm [shape: f32[2,16,32], index: 11, kind: output, shape index: {1}]
  %12 = xla_tuple %s10, %s11
  %s13 = sld [smem:[#allocation0]]
  $region81: #{node_feed_forward.1} parent=0
    _
  %s15 = ssub.s32 1, %s13
  %s16 = scalar_select 0, %s15, %s13
  $region1: #{node_feed_forward.1} parent=0
    #allocation2 [shape = 'u8[16384]{0}', space=vmem, size = 0x4000, scoped, tag = 'output window, operand 1']
    #allocation3 [shape = 's32[2]{0}', space=sflag, size = 0x8, scoped, tag = 'scoped memory for node_feed_forward.1']
    %17 = vsyncpa [#allocation3], 0
    %s18 = scalar_lea.sflag [#allocation3], 1
    %19 = vsyncpa %s18, 0
    loop: start=0, step=1, limit=4
    $region2: #{node_feed_forward.1} parent=1 // loop_pre_header
      _
    $region3: #{node_feed_forward.1} parent=1 // loop_header
      %s21 = sphi 0, %s25
      %p22 = scmp.ge.s32.totalorder %s21, 4
      %s31 = sphi 0, %s33
      %s34 = sphi 0, %s31
      %s35 = sphi 0, %s34
      %s51 = sphi 0, %s35
      %s57 = sphi 0, %s59
      %s60 = sphi 0, %s57
      %s61 = sphi 0, %s60
      %s77 = sphi 0, %s61
      %s83 = sphi 0, %s85
      %s86 = sphi 0, %s83
      %s87 = sphi 0, %s86
      %s103 = sphi 0, %s87
      %s107 = sphi 0, %s107
      %s109 = sphi 0, %s107
      %s110 = sphi 0, %s109
      %s124 = sphi 0, %s110
      %s128 = sphi 0, %s128
      %s130 = sphi 0, %s128
      %s131 = sphi 0, %s130
      %s145 = sphi 0, %s131
      %s149 = sphi 0, %s149
      %s151 = sphi 0, %s149
      %s152 = sphi 0, %s151
      %s166 = sphi 0, %s152
      %s170 = sphi 0, %s170
      %s172 = sphi 0, %s170
      %s173 = sphi 0, %s172
      %s187 = sphi 0, %s173
      %s191 = sphi 0, %s191
      %s193 = sphi 0, %s191
      %s194 = sphi 0, %s193
      %s208 = sphi 0, %s194
      %s212 = sphi 0, %s212
      %s214 = sphi 0, %s212
      %s215 = sphi 0, %s214
      %s229 = sphi 0, %s215
      %s233 = sphi 0, %s233
      %s235 = sphi 0, %s233
      %s236 = sphi 0, %s235
      %s250 = sphi 0, %s236
      %s256 = sphi 0, %s258
      %s259 = sphi 0, %s256
      %s260 = sphi 0, %s259
      %s276 = sphi 0, %s260
      %s282 = sphi 0, %s284
      %s285 = sphi 0, %s282
      %s286 = sphi 0, %s285
      %s302 = sphi 0, %s286
    $region4: #{node_feed_forward.1} parent=1 // loop_header_branch
      %24 = sbr.rel (%p22) target = $region8
    $region5: #{node_feed_forward.1} parent=1 // loop_body
      %s26 = ssub.s32 %s21, 1
      %s27 = ssub.s32 %s21, 2
      %s28 = sadd.s32 %s21, 1
      %s29 = ssub.s32 %s21, %s28
      %p30 = scmp.eq.s32.totalorder %s29, 0
      %s32 = sadd.s32 %s31, 1
      %s33 = scalar_select %p30, %s31, %s32
      %p36 = pneg %p30
      %p37 = scmp.eq.s32.totalorder %s21, 1
      %p38 = por %p36, %p37
      %p39 = scmp.ne.s32.totalorder %s31, %s34
      %p40 = scmp.eq.s32.totalorder %s21, 0
      %p41 = por %p39, %p40
      %p42 = scmp.ne.s32.totalorder %s31, %s34
      %p43 = scmp.eq.s32.totalorder %s26, 1
      %p44 = por %p42, %p43
      %p45 = scmp.ne.s32.totalorder %s34, %s35
      %p46 = scmp.eq.s32.totalorder %s26, 0
      %p47 = por %p45, %p46
      %p48 = scmp.ne.s32.totalorder %s34, %s35
      %p49 = scmp.eq.s32.totalorder %s27, 1
      %p50 = por %p48, %p49
      %p52 = scmp.ne.s32.totalorder %s35, %s51
      %p53 = scmp.eq.s32.totalorder %s27, 0
      %p54 = por %p52, %p53
      %s55 = ssub.s32 %s21, %s28
      %p56 = scmp.eq.s32.totalorder %s55, 0
      %s58 = sadd.s32 %s57, 1
      %s59 = scalar_select %p56, %s57, %s58
      %p62 = pneg %p56
      %p63 = scmp.eq.s32.totalorder %s21, 1
      %p64 = por %p62, %p63
      %p65 = scmp.ne.s32.totalorder %s57, %s60
      %p66 = scmp.eq.s32.totalorder %s21, 0
      %p67 = por %p65, %p66
      %p68 = scmp.ne.s32.totalorder %s57, %s60
      %p69 = scmp.eq.s32.totalorder %s26, 1
      %p70 = por %p68, %p69
      %p71 = scmp.ne.s32.totalorder %s60, %s61
      %p72 = scmp.eq.s32.totalorder %s26, 0
      %p73 = por %p71, %p72
      %p74 = scmp.ne.s32.totalorder %s60, %s61
      %p75 = scmp.eq.s32.totalorder %s27, 1
      %p76 = por %p74, %p75
      %p78 = scmp.ne.s32.totalorder %s61, %s77
      %p79 = scmp.eq.s32.totalorder %s27, 0
      %p80 = por %p78, %p79
      %s81 = ssub.s32 %s21, %s28
      %p82 = scmp.eq.s32.totalorder %s81, 0
      %s84 = sadd.s32 %s83, 1
      %s85 = scalar_select %p82, %s83, %s84
      %p88 = pneg %p82
      %p89 = scmp.eq.s32.totalorder %s21, 1
      %p90 = por %p88, %p89
      %p91 = scmp.ne.s32.totalorder %s83, %s86
      %p92 = scmp.eq.s32.totalorder %s21, 0
      %p93 = por %p91, %p92
      %p94 = scmp.ne.s32.totalorder %s83, %s86
      %p95 = scmp.eq.s32.totalorder %s26, 1
      %p96 = por %p94, %p95
      %p97 = scmp.ne.s32.totalorder %s86, %s87
      %p98 = scmp.eq.s32.totalorder %s26, 0
      %p99 = por %p97, %p98
      %p100 = scmp.ne.s32.totalorder %s86, %s87
      %p101 = scmp.eq.s32.totalorder %s27, 1
      %p102 = por %p100, %p101
      %p104 = scmp.ne.s32.totalorder %s87, %s103
      %p105 = scmp.eq.s32.totalorder %s27, 0
      %p106 = por %p104, %p105
      %s108 = sadd.s32 %s107, 1
      %p111 = scmp.eq.s32.totalorder %s21, 1
      %p112 = scmp.ne.s32.totalorder %s107, %s109
      %p113 = scmp.eq.s32.totalorder %s21, 0
      %p114 = por %p112, %p113
      %p115 = scmp.ne.s32.totalorder %s107, %s109
      %p116 = scmp.eq.s32.totalorder %s26, 1
      %p117 = por %p115, %p116
      %p118 = scmp.ne.s32.totalorder %s109, %s110
      %p119 = scmp.eq.s32.totalorder %s26, 0
      %p120 = por %p118, %p119
      %p121 = scmp.ne.s32.totalorder %s109, %s110
      %p122 = scmp.eq.s32.totalorder %s27, 1
      %p123 = por %p121, %p122
      %p125 = scmp.ne.s32.totalorder %s110, %s124
      %p126 = scmp.eq.s32.totalorder %s27, 0
      %p127 = por %p125, %p126
      %s129 = sadd.s32 %s128, 1
      %p132 = scmp.eq.s32.totalorder %s21, 1
      %p133 = scmp.ne.s32.totalorder %s128, %s130
      %p134 = scmp.eq.s32.totalorder %s21, 0
      %p135 = por %p133, %p134
      %p136 = scmp.ne.s32.totalorder %s128, %s130
      %p137 = scmp.eq.s32.totalorder %s26, 1
      %p138 = por %p136, %p137
      %p139 = scmp.ne.s32.totalorder %s130, %s131
      %p140 = scmp.eq.s32.totalorder %s26, 0
      %p141 = por %p139, %p140
      %p142 = scmp.ne.s32.totalorder %s130, %s131
      %p143 = scmp.eq.s32.totalorder %s27, 1
      %p144 = por %p142, %p143
      %p146 = scmp.ne.s32.totalorder %s131, %s145
      %p147 = scmp.eq.s32.totalorder %s27, 0
      %p148 = por %p146, %p147
      %s150 = sadd.s32 %s149, 1
      %p153 = scmp.eq.s32.totalorder %s21, 1
      %p154 = scmp.ne.s32.totalorder %s149, %s151
      %p155 = scmp.eq.s32.totalorder %s21, 0
      %p156 = por %p154, %p155
      %p157 = scmp.ne.s32.totalorder %s149, %s151
      %p158 = scmp.eq.s32.totalorder %s26, 1
      %p159 = por %p157, %p158
      %p160 = scmp.ne.s32.totalorder %s151, %s152
      %p161 = scmp.eq.s32.totalorder %s26, 0
      %p162 = por %p160, %p161
      %p163 = scmp.ne.s32.totalorder %s151, %s152
      %p164 = scmp.eq.s32.totalorder %s27, 1
      %p165 = por %p163, %p164
      %p167 = scmp.ne.s32.totalorder %s152, %s166
      %p168 = scmp.eq.s32.totalorder %s27, 0
      %p169 = por %p167, %p168
      %s171 = sadd.s32 %s170, 1
      %p174 = scmp.eq.s32.totalorder %s21, 1
      %p175 = scmp.ne.s32.totalorder %s170, %s172
      %p176 = scmp.eq.s32.totalorder %s21, 0
      %p177 = por %p175, %p176
      %p178 = scmp.ne.s32.totalorder %s170, %s172
      %p179 = scmp.eq.s32.totalorder %s26, 1
      %p180 = por %p178, %p179
      %p181 = scmp.ne.s32.totalorder %s172, %s173
      %p182 = scmp.eq.s32.totalorder %s26, 0
      %p183 = por %p181, %p182
      %p184 = scmp.ne.s32.totalorder %s172, %s173
      %p185 = scmp.eq.s32.totalorder %s27, 1
      %p186 = por %p184, %p185
      %p188 = scmp.ne.s32.totalorder %s173, %s187
      %p189 = scmp.eq.s32.totalorder %s27, 0
      %p190 = por %p188, %p189
      %s192 = sadd.s32 %s191, 1
      %p195 = scmp.eq.s32.totalorder %s21, 1
      %p196 = scmp.ne.s32.totalorder %s191, %s193
      %p197 = scmp.eq.s32.totalorder %s21, 0
      %p198 = por %p196, %p197
      %p199 = scmp.ne.s32.totalorder %s191, %s193
      %p200 = scmp.eq.s32.totalorder %s26, 1
      %p201 = por %p199, %p200
      %p202 = scmp.ne.s32.totalorder %s193, %s194
      %p203 = scmp.eq.s32.totalorder %s26, 0
      %p204 = por %p202, %p203
      %p205 = scmp.ne.s32.totalorder %s193, %s194
      %p206 = scmp.eq.s32.totalorder %s27, 1
      %p207 = por %p205, %p206
      %p209 = scmp.ne.s32.totalorder %s194, %s208
      %p210 = scmp.eq.s32.totalorder %s27, 0
      %p211 = por %p209, %p210
      %s213 = sadd.s32 %s212, 1
      %p216 = scmp.eq.s32.totalorder %s21, 1
      %p217 = scmp.ne.s32.totalorder %s212, %s214
      %p218 = scmp.eq.s32.totalorder %s21, 0
      %p219 = por %p217, %p218
      %p220 = scmp.ne.s32.totalorder %s212, %s214
      %p221 = scmp.eq.s32.totalorder %s26, 1
      %p222 = por %p220, %p221
      %p223 = scmp.ne.s32.totalorder %s214, %s215
      %p224 = scmp.eq.s32.totalorder %s26, 0
      %p225 = por %p223, %p224
      %p226 = scmp.ne.s32.totalorder %s214, %s215
      %p227 = scmp.eq.s32.totalorder %s27, 1
      %p228 = por %p226, %p227
      %p230 = scmp.ne.s32.totalorder %s215, %s229
      %p231 = scmp.eq.s32.totalorder %s27, 0
      %p232 = por %p230, %p231
      %s234 = sadd.s32 %s233, 1
      %p237 = scmp.eq.s32.totalorder %s21, 1
      %p238 = scmp.ne.s32.totalorder %s233, %s235
      %p239 = scmp.eq.s32.totalorder %s21, 0
      %p240 = por %p238, %p239
      %p241 = scmp.ne.s32.totalorder %s233, %s235
      %p242 = scmp.eq.s32.totalorder %s26, 1
      %p243 = por %p241, %p242
      %p244 = scmp.ne.s32.totalorder %s235, %s236
      %p245 = scmp.eq.s32.totalorder %s26, 0
      %p246 = por %p244, %p245
      %p247 = scmp.ne.s32.totalorder %s235, %s236
      %p248 = scmp.eq.s32.totalorder %s27, 1
      %p249 = por %p247, %p248
      %p251 = scmp.ne.s32.totalorder %s236, %s250
      %p252 = scmp.eq.s32.totalorder %s27, 0
      %p253 = por %p251, %p252
      %s254 = ssub.s32 %s21, %s28
      %p255 = scmp.eq.s32.totalorder %s254, 0
      %s257 = sadd.s32 %s256, 1
      %s258 = scalar_select %p255, %s256, %s257
      %p261 = pneg %p255
      %p262 = scmp.eq.s32.totalorder %s21, 1
      %p263 = por %p261, %p262
      %p264 = scmp.ne.s32.totalorder %s256, %s259
      %p265 = scmp.eq.s32.totalorder %s21, 0
      %p266 = por %p264, %p265
      %p267 = scmp.ne.s32.totalorder %s256, %s259
      %p268 = scmp.eq.s32.totalorder %s26, 1
      %p269 = por %p267, %p268
      %p270 = scmp.ne.s32.totalorder %s259, %s260
      %p271 = scmp.eq.s32.totalorder %s26, 0
      %p272 = por %p270, %p271
      %p273 = scmp.ne.s32.totalorder %s259, %s260
      %p274 = scmp.eq.s32.totalorder %s27, 1
      %p275 = por %p273, %p274
      %p277 = scmp.ne.s32.totalorder %s260, %s276
      %p278 = scmp.eq.s32.totalorder %s27, 0
      %p279 = por %p277, %p278
      %s280 = ssub.s32 %s21, %s28
      %p281 = scmp.eq.s32.totalorder %s280, 0
      %s283 = sadd.s32 %s282, 1
      %s284 = scalar_select %p281, %s282, %s283
      %p287 = pneg %p281
      %p288 = scmp.eq.s32.totalorder %s21, 1
      %p289 = por %p287, %p288
      %p290 = scmp.ne.s32.totalorder %s282, %s285
      %p291 = scmp.eq.s32.totalorder %s21, 0
      %p292 = por %p290, %p291
      %p293 = scmp.ne.s32.totalorder %s282, %s285
      %p294 = scmp.eq.s32.totalorder %s26, 1
      %p295 = por %p293, %p294
      %p296 = scmp.ne.s32.totalorder %s285, %s286
      %p297 = scmp.eq.s32.totalorder %s26, 0
      %p298 = por %p296, %p297
      %p299 = scmp.ne.s32.totalorder %s285, %s286
      %p300 = scmp.eq.s32.totalorder %s27, 1
      %p301 = por %p299, %p300
      %p303 = scmp.ne.s32.totalorder %s286, %s302
      %p304 = scmp.eq.s32.totalorder %s27, 0
      %p305 = por %p303, %p304
      %p306 = scmp.le.s32.totalorder 1, %s21
      %p307 = scmp.lt.s32.totalorder %s21, 3
      %p308 = pnand %p306, %p307
      %p309 = pneg %p308
      // Predicated region
      $region9: #{node_feed_forward.1} parent=5 // pred_check
        _
      $region10: #{node_feed_forward.1} parent=5 // pred_check_branch
        %311 = sbr.rel (%p308) target = $region12
      $region11: #{node_feed_forward.1} parent=5 // pred_region
        %s312 = ssub.s32 %s21, 1
        // Predicated region
        $region13: #{node_feed_forward.1} parent=11 // pred_check
          %p313 = pneg %p120
        $region14: #{node_feed_forward.1} parent=11 // pred_check_branch
          %315 = sbr.rel (%p313) target = $region16
        $region15: #{node_feed_forward.1} parent=11 // pred_region
          _
        $region16: #{node_feed_forward.1} parent=11 // pred_fallthru
          _
        // Predicated region
        $region17: #{node_feed_forward.1} parent=11 // pred_check
          %p316 = pneg %p141
        $region18: #{node_feed_forward.1} parent=11 // pred_check_branch
          %318 = sbr.rel (%p316) target = $region20
        $region19: #{node_feed_forward.1} parent=11 // pred_region
          _
        $region20: #{node_feed_forward.1} parent=11 // pred_fallthru
          _
        // Predicated region
        $region21: #{node_feed_forward.1} parent=11 // pred_check
          %p319 = pneg %p162
        $region22: #{node_feed_forward.1} parent=11 // pred_check_branch
          %321 = sbr.rel (%p319) target = $region24
        $region23: #{node_feed_forward.1} parent=11 // pred_region
          _
        $region24: #{node_feed_forward.1} parent=11 // pred_fallthru
          _
        // Predicated region
        $region25: #{node_feed_forward.1} parent=11 // pred_check
          %p322 = pneg %p183
        $region26: #{node_feed_forward.1} parent=11 // pred_check_branch
          %324 = sbr.rel (%p322) target = $region28
        $region27: #{node_feed_forward.1} parent=11 // pred_region
          _
        $region28: #{node_feed_forward.1} parent=11 // pred_fallthru
          _
        // Predicated region
        $region29: #{node_feed_forward.1} parent=11 // pred_check
          %p325 = pneg %p204
        $region30: #{node_feed_forward.1} parent=11 // pred_check_branch
          %327 = sbr.rel (%p325) target = $region32
        $region31: #{node_feed_forward.1} parent=11 // pred_region
          _
        $region32: #{node_feed_forward.1} parent=11 // pred_fallthru
          _
        // Predicated region
        $region33: #{node_feed_forward.1} parent=11 // pred_check
          %p328 = pneg %p225
        $region34: #{node_feed_forward.1} parent=11 // pred_check_branch
          %330 = sbr.rel (%p328) target = $region36
        $region35: #{node_feed_forward.1} parent=11 // pred_region
          _
        $region36: #{node_feed_forward.1} parent=11 // pred_fallthru
          _
        // Predicated region
        $region37: #{node_feed_forward.1} parent=11 // pred_check
          %p331 = pneg %p246
        $region38: #{node_feed_forward.1} parent=11 // pred_check_branch
          %333 = sbr.rel (%p331) target = $region40
        $region39: #{node_feed_forward.1} parent=11 // pred_region
          _
        $region40: #{node_feed_forward.1} parent=11 // pred_fallthru
          _
      $region12: #{node_feed_forward.1} parent=5 // pred_fallthru
        _
      %p334 = scmp.lt.s32.totalorder %s21, 2
      // Predicated region
      $region41: #{node_feed_forward.1} parent=5 // pred_check
        %p335 = pneg %p334
      $region42: #{node_feed_forward.1} parent=5 // pred_check_branch
        %337 = sbr.rel (%p335) target = $region44
      $region43: #{node_feed_forward.1} parent=5 // pred_region
        // Predicated region
        $region45: #{node_feed_forward.1} parent=43 // pred_check
          %p338 = pneg %p41
        $region46: #{node_feed_forward.1} parent=43 // pred_check_branch
          %340 = sbr.rel (%p338) target = $region48
        $region47: #{node_feed_forward.1} parent=43 // pred_region
          %p341 = scmp.lt.s32.totalorder %s21, 1
          %s342 = scalar_select %p341, %s21, 1
          %s343 = smul.addr %s342, 4
          %s344 = smul.addr %s343, 4
          %s345 = scalar_lea.vmem %s0, %s344
        $region48: #{node_feed_forward.1} parent=43 // pred_fallthru
          _
        // Predicated region
        $region49: #{node_feed_forward.1} parent=43 // pred_check
          %p346 = pneg %p67
        $region50: #{node_feed_forward.1} parent=43 // pred_check_branch
          %348 = sbr.rel (%p346) target = $region52
        $region51: #{node_feed_forward.1} parent=43 // pred_region
          %p349 = scmp.lt.s32.totalorder %s21, 1
          %s350 = scalar_select %p349, %s21, 1
          %s351 = smul.addr %s350, 2
          %s352 = smul.addr %s351, 8
          %s353 = scalar_lea.vmem %s1, %s352
        $region52: #{node_feed_forward.1} parent=43 // pred_fallthru
          _
        // Predicated region
        $region53: #{node_feed_forward.1} parent=43 // pred_check
          %p354 = pneg %p93
        $region54: #{node_feed_forward.1} parent=43 // pred_check_branch
          %356 = sbr.rel (%p354) target = $region56
        $region55: #{node_feed_forward.1} parent=43 // pred_region
          %p357 = scmp.lt.s32.totalorder %s21, 1
          %s358 = scalar_select %p357, %s21, 1
          %s359 = smul.addr %s358, 4
          %s360 = scalar_lea.vmem %s2, %s359
        $region56: #{node_feed_forward.1} parent=43 // pred_fallthru
          _
      $region44: #{node_feed_forward.1} parent=5 // pred_fallthru
        _
      %p361 = scmp.le.s32.totalorder 1, %s21
      %p362 = scmp.lt.s32.totalorder %s21, 3
      %p363 = pnand %p361, %p362
      %p364 = pneg %p363
      // Predicated region
      $region57: #{node_feed_forward.1} parent=5 // pred_check
        _
      $region58: #{node_feed_forward.1} parent=5 // pred_check_branch
        %366 = sbr.rel (%p363) target = $region60
      $region59: #{node_feed_forward.1} parent=5 // pred_region
        %s367 = ssub.s32 %s21, 1
        %p368 = scmp.lt.s32.totalorder %s26, 1
        %s369 = scalar_select %p368, %s26, 1
        %s370 = smul.addr %s369, 4
        %s371 = smul.addr %s370, 4
        %s372 = scalar_lea.vmem %s0, %s371
        %p373 = pneg %p47
        %p374 = pneg %p44
        %p375 = scmp.lt.s32.totalorder %s26, 1
        %s376 = scalar_select %p375, %s26, 1
        %s377 = smul.addr %s376, 2
        %s378 = smul.addr %s377, 8
        %s379 = scalar_lea.vmem %s1, %s378
        %p380 = pneg %p73
        %p381 = pneg %p70
        %p382 = scmp.lt.s32.totalorder %s26, 1
        %s383 = scalar_select %p382, %s26, 1
        %s384 = smul.addr %s383, 4
        %s385 = scalar_lea.vmem %s2, %s384
        %p386 = pneg %p99
        %p387 = pneg %p96
        %p388 = pneg %p120
        %p389 = pneg %p117
        %p390 = pneg %p141
        %p391 = pneg %p138
        %p392 = pneg %p162
        %p393 = pneg %p159
        %p394 = pneg %p183
        %p395 = pneg %p180
        %p396 = pneg %p204
        %p397 = pneg %p201
        %p398 = pneg %p225
        %p399 = pneg %p222
        %p400 = pneg %p246
        %p401 = pneg %p243
        %p402 = pneg %p272
        %p403 = pneg %p269
        %p404 = scmp.lt.s32.totalorder %s26, 1
        %s405 = scalar_select %p404, %s26, 1
        %s406 = smul.addr %s405, 4
        %s407 = smul.addr %s406, 4
        %s408 = scalar_lea.vmem %s10, %s407
        %p409 = pneg %p298
        %p410 = pneg %p295
        %s411 = sand.u32 %s285, 1
        %s412 = scalar_lea.sflag [#allocation3], %s411
        %s413 = sand.u32 %s285, 1
        %s414 = smul.addr %s413, 16
        %s415 = scalar_lea.vmem [#allocation2], %s414
        %p416 = scmp.lt.s32.totalorder %s26, 1
        %s417 = scalar_select %p416, %s26, 1
        %s418 = smul.addr %s417, 4
        %s419 = smul.addr %s418, 4
        %s420 = scalar_lea.vmem %s0, %s419
        %p421 = scmp.lt.s32.totalorder %s26, 1
        %s422 = scalar_select %p421, %s26, 1
        %s423 = smul.addr %s422, 2
        %s424 = smul.addr %s423, 8
        %s425 = scalar_lea.vmem %s1, %s424
        %p426 = scmp.lt.s32.totalorder %s26, 1
        %s427 = scalar_select %p426, %s26, 1
        %s428 = smul.addr %s427, 4
        %s429 = scalar_lea.vmem %s2, %s428
        %p430 = scmp.lt.s32.totalorder %s26, 1
        %s431 = scalar_select %p430, %s26, 1
        %s432 = smul.addr %s431, 4
        %s433 = smul.addr %s432, 4
        %s434 = scalar_lea.vmem %s10, %s433
        %v435 = vld [vmem:[%s420] sm:$0x7]
        %v436 = vld [vmem:[%s420 + $0x4] sm:$0x7]
        %v437 = vld [vmem:[%s420 + $0x8] sm:$0x7]
        %v438 = vld [vmem:[%s420 + $0xc] sm:$0x7]
        %v439 = vld [vmem:[%s425] sm:$0xff]
        %v440 = vld [vmem:[%s425 + $0x8] sm:$0xff]
        %v441 = vld [vmem:[%s429] sm:$0xf]
        %v442 = vld [vmem:[%s3] sm:$0x1]
        %v443 = vld [vmem:[%s3 + $0x1] sm:$0x1]
        %v444 = vld [vmem:[%s3 + $0x2] sm:$0x1]
        %v445 = vld [vmem:[%s9] sm:$0x1]
        %v446 = vld [vmem:[%s9 + $0x1] sm:$0x1]
        %v447 = vld [vmem:[%s9 + $0x2] sm:$0x1]
        %vm448 = vcmask 261120
        %v449 = vsel %vm448, %v439, 0.0
        %450 = vadd.xlane.f32.xlu0 %v449
        %v451 = vpop.xlane.xlu0 %450
        %v452 = vsel %vm448, %v440, 0.0
        %453 = vadd.xlane.f32.xlu0 %v452
        %v454 = vpop.xlane.xlu0 %453
        %v455 = vrcp.pop 32.0
        %v456 = vmul.f32 %v451, %v455
        %v457 = vmul.f32 %v454, %v455
        %v458 = vmul.f32 %v439, %v439
        %v459 = vmul.f32 %v440, %v440
        %v460 = vsel %vm448, %v458, 0.0
        %461 = vadd.xlane.f32.xlu0 %v460
        %v462 = vpop.xlane.xlu0 %461
        %v463 = vsel %vm448, %v459, 0.0
        %464 = vadd.xlane.f32.xlu0 %v463
        %v465 = vpop.xlane.xlu0 %464
        %v466 = vmul.f32 %v462, %v455
        %v467 = vmul.f32 %v465, %v455
        %v468 = vmul.f32 %v456, %v456
        %v469 = vmul.f32 %v457, %v457
        %v470 = vsub.f32 %v466, %v468
        %v471 = vsub.f32 %v467, %v469
        %v472 = vmax.f32 %v470, 0.0
        %v473 = vmax.f32 %v471, 0.0
        %v474 = vsub.f32 %v439, %v456
        %v475 = vsub.f32 %v440, %v457
        %v476 = vadd.f32 %v472, 1e-05
        %v477 = vadd.f32 %v473, 1e-05
        %v478 = vrsqrt.pop %v476
        %v479 = vrsqrt.pop %v477
        %v480 = vmul.f32 %v474, %v478
        %v481 = vmul.f32 %v475, %v479
        %v482 = vlaneseq
        %v483 = vshrl.u32 %v482, 7
        %v484 = vsub.s32 0, %v483
        %v485 = vrot.slane %v442, %v484
        %v486 = vmul.f32 %v480, %v485
        %v487 = vmul.f32 %v481, %v485
        %v488 = vlaneseq
        %v489 = vshrl.u32 %v488, 7
        %v490 = vsub.s32 0, %v489
        %v491 = vrot.slane %v443, %v490
        %v492 = vadd.f32 %v486, %v491
        %v493 = vadd.f32 %v487, %v491
        %v496 = vunpack.c.l.s4 1966171168
        %v497 = vunpack.c.0.s8 %v496
        %v498 = vlaneseq
        %v499 = vshrl.u32 %v498, 7
        %v500 = vsub.s32 %v497, %v499
        %v501 = vrot.slane %v441, %v500
        %v502 = vcombine.high %v501, %v501
        %v504 = vunpack.c.l.s4 1966171168
        %v505 = vunpack.c.0.s8 %v504
        %v506 = vlaneseq
        %v507 = vshrl.u32 %v506, 7
        %v508 = vsub.s32 %v505, %v507
        %v509 = vrot.slane %v501, %v508
        %v511 = vunpack.c.l.s4 1966171168
        %v512 = vunpack.c.0.s8 %v511
        %v513 = vlaneseq
        %v514 = vshrl.u32 %v513, 7
        %v515 = vsub.s32 %v512, %v514
        %v516 = vrot.slane %v502, %v515
        %v517 = vcombine.high %v509, %v509
        %v518 = vcombine.high %v516, %v516
        %vm519 = vcmask 125952
        %v520 = vsel %vm519, %v441, 0.0
        %521 = vadd.xlane.f32.xlu0 %v520
        %v522 = vpop.xlane.xlu0 %521
        %v523 = vmax.f32 %v522, 1.0
        %v524 = vlaneseq
        %v525 = vshrl.u32 %v524, 7
        %v526 = vsub.s32 0, %v525
        %v527 = vrot.slane %v509, %v526
        %v528 = vlaneseq
        %v529 = vshrl.u32 %v528, 7
        %v530 = vsub.s32 0, %v529
        %v531 = vrot.slane %v516, %v530
        %v532 = vlaneseq
        %v533 = vshrl.u32 %v532, 7
        %v534 = vsub.s32 0, %v533
        %v535 = vrot.slane %v517, %v534
        %v536 = vlaneseq
        %v537 = vshrl.u32 %v536, 7
        %v538 = vsub.s32 0, %v537
        %v539 = vrot.slane %v518, %v538
        %v544 = vmul.f32 %v435, %v527
        %v545 = vmul.f32 %v436, %v531
        %v546 = vmul.f32 %v437, %v535
        %v547 = vmul.f32 %v438, %v539
        %vm548 = vcmask 124928
        %v549 = vsel %vm548, %v544, 0.0
        %550 = vadd.xlane.f32.xlu0 %v549
        %v551 = vpop.xlane.xlu0 %550
        %v552 = vsel %vm548, %v545, 0.0
        %553 = vadd.xlane.f32.xlu0 %v552
        %v554 = vpop.xlane.xlu0 %553
        %v555 = vsel %vm548, %v546, 0.0
        %556 = vadd.xlane.f32.xlu0 %v555
        %v557 = vpop.xlane.xlu0 %556
        %v558 = vsel %vm548, %v547, 0.0
        %559 = vadd.xlane.f32.xlu0 %v558
        %v560 = vpop.xlane.xlu0 %559
        %v562 = vlaneseq
        %v563 = vshrl.u32 %v562, 7
        %v564 = vsub.s32 0, %v563
        %v565 = vrot.slane %v523, %v564
        %v566 = vlaneseq
        %v567 = vshrl.u32 %v566, 7
        %v568 = vsub.s32 1, %v567
        %v569 = vrot.slane %v523, %v568
        %v570 = vlaneseq
        %v571 = vshrl.u32 %v570, 7
        %v572 = vsub.s32 2, %v571
        %v573 = vrot.slane %v523, %v572
        %v574 = vlaneseq
        %v575 = vshrl.u32 %v574, 7
        %v576 = vsub.s32 3, %v575
        %v577 = vrot.slane %v523, %v576
        %v582 = vrcp.pop %v565
        %v583 = vmul.f32 %v551, %v582
        %v584 = vrcp.pop %v569
        %v585 = vmul.f32 %v554, %v584
        %v586 = vrcp.pop %v573
        %v587 = vmul.f32 %v557, %v586
        %v588 = vrcp.pop %v577
        %v589 = vmul.f32 %v560, %v588
        %v590 = vsub.f32 %v435, %v583
        %v591 = vsub.f32 %v436, %v585
        %v592 = vsub.f32 %v437, %v587
        %v593 = vsub.f32 %v438, %v589
        %v594 = vmul.f32 %v590, %v527
        %v595 = vmul.f32 %v591, %v531
        %v596 = vmul.f32 %v592, %v535
        %v597 = vmul.f32 %v593, %v539
        %v598 = vmul.f32 %v594, %v594
        %v599 = vmul.f32 %v595, %v595
        %v600 = vmul.f32 %v596, %v596
        %v601 = vmul.f32 %v597, %v597
        %v606 = vrot.slane %v598, 1
        %v607 = vrot.slane %v599, 1
        %v608 = vrot.slane %v600, 1
        %v609 = vrot.slane %v601, 1
        %v614 = vadd.f32 %v598, %v606
        %v615 = vadd.f32 %v599, %v607
        %v616 = vadd.f32 %v600, %v608
        %v617 = vadd.f32 %v601, %v609
        %v618 = vrot.slane %v598, 2
        %v619 = vrot.slane %v599, 2
        %v620 = vrot.slane %v600, 2
        %v621 = vrot.slane %v601, 2
        %v626 = vadd.f32 %v614, %v618
        %v627 = vadd.f32 %v615, %v619
        %v628 = vadd.f32 %v616, %v620
        %v629 = vadd.f32 %v617, %v621
        %v630 = vrsqrt.pop %v626
        %v631 = vmul.f32 %v626, %v630
        %vm632 = vcmp.eq.f32.partialorder %v626, inf
        %v633 = vsel %vm632, %v626, %v631
        %vm634 = vcmp.eq.f32.partialorder %v626, 0.0
        %v635 = vand.u32 %v626, 2147483648
        %v636 = vsel %vm634, %v635, %v633
        %v637 = vrsqrt.pop %v627
        %v638 = vmul.f32 %v627, %v637
        %vm639 = vcmp.eq.f32.partialorder %v627, inf
        %v640 = vsel %vm639, %v627, %v638
        %vm641 = vcmp.eq.f32.partialorder %v627, 0.0
        %v642 = vand.u32 %v627, 2147483648
        %v643 = vsel %vm641, %v642, %v640
        %v644 = vrsqrt.pop %v628
        %v645 = vmul.f32 %v628, %v644
        %vm646 = vcmp.eq.f32.partialorder %v628, inf
        %v647 = vsel %vm646, %v628, %v645
        %vm648 = vcmp.eq.f32.partialorder %v628, 0.0
        %v649 = vand.u32 %v628, 2147483648
        %v650 = vsel %vm648, %v649, %v647
        %v651 = vrsqrt.pop %v629
        %v652 = vmul.f32 %v629, %v651
        %vm653 = vcmp.eq.f32.partialorder %v629, inf
        %v654 = vsel %vm653, %v629, %v652
        %vm655 = vcmp.eq.f32.partialorder %v629, 0.0
        %v656 = vand.u32 %v629, 2147483648
        %v657 = vsel %vm655, %v656, %v654
        %v662 = vrot.slane %v643, 7
        %vm663 = vcmask 1041409
        %v664 = vsel %vm663, %v662, %v636
        %v665 = vrot.slane %v650, 6
        %vm666 = vcmask 1042434
        %v667 = vsel %vm666, %v665, %v664
        %v668 = vrot.slane %v657, 5
        %vm669 = vcmask 1043459
        %v670 = vsel %vm669, %v668, %v667
        %v672 = vsel %vm519, %v670, 0.0
        %673 = vadd.xlane.f32.xlu0 %v672
        %v674 = vpop.xlane.xlu0 %673
        %v675 = vrcp.pop %v523
        %v676 = vmul.f32 %v674, %v675
        %v677 = vadd.f32 %v676, 1e-06
        %v678 = vrcp.pop %v677
        %v679 = vmul.f32 1.0, %v678
        %v680 = vlaneseq
        %v681 = vshrl.u32 %v680, 7
        %v682 = vsub.s32 0, %v681
        %v683 = vrot.slane %v445, %v682
        %685 = vbcast.lane.b32.xlu0 %v683, 256
        %v686 = vpop.permute.xlu0 %685
        %v687 = vlaneseq
        %v688 = vshrl.u32 %v687, 7
        %v689 = vsub.s32 0, %v688
        %v690 = vrot.slane %v686, %v689
        %v691 = vlaneseq
        %v692 = vshrl.u32 %v691, 7
        %v693 = vsub.s32 1, %v692
        %v694 = vrot.slane %v686, %v693
        %v695 = vlaneseq
        %v696 = vshrl.u32 %v695, 7
        %v697 = vsub.s32 2, %v696
        %v698 = vrot.slane %v686, %v697
        %v699 = vlaneseq
        %v700 = vshrl.u32 %v699, 7
        %v701 = vsub.s32 3, %v700
        %v702 = vrot.slane %v686, %v701
        %v704 = vlaneseq
        %v705 = vshrl.u32 %v704, 7
        %v706 = vsub.s32 0, %v705
        %v707 = vrot.slane %v679, %v706
        %v708 = vlaneseq
        %v709 = vshrl.u32 %v708, 7
        %v710 = vsub.s32 1, %v709
        %v711 = vrot.slane %v679, %v710
        %v712 = vlaneseq
        %v713 = vshrl.u32 %v712, 7
        %v714 = vsub.s32 2, %v713
        %v715 = vrot.slane %v679, %v714
        %v716 = vlaneseq
        %v717 = vshrl.u32 %v716, 7
        %v718 = vsub.s32 3, %v717
        %v719 = vrot.slane %v679, %v718
        %v724 = vmul.f32 %v690, %v707
        %v725 = vmul.f32 %v694, %v711
        %v726 = vmul.f32 %v698, %v715
        %v727 = vmul.f32 %v702, %v719
        %v728 = vmul.f32 %v594, %v724
        %v729 = vmul.f32 %v595, %v725
        %v730 = vmul.f32 %v596, %v726
        %v731 = vmul.f32 %v597, %v727
        %v732 = vand.u32 2147483647, %v445
        %v733 = vlaneseq
        %v734 = vshrl.u32 %v733, 7
        %v735 = vsub.s32 0, %v734
        %v736 = vrot.slane %v732, %v735
        %738 = vbcast.lane.b32.xlu0 %v736, 256
        %v739 = vpop.permute.xlu0 %738
        %v740 = vmul.f32 %v739, %v679
        %v742 = vrot.slane %v740, 1
        %v743 = vrot.slane %v740, 2
        %v744 = vrot.slane %v740, 3
        %v749 = vmul.f32 %v636, %v740
        %v750 = vmul.f32 %v643, %v742
        %v751 = vmul.f32 %v650, %v743
        %v752 = vmul.f32 %v657, %v744
        %v753 = vld [vmem:[%s4] sm:$0xff]
        %v754 = vld [vmem:[%s4 + $0x8] sm:$0xff]
        %v755 = vld [vmem:[%s4 + $0x10] sm:$0xff]
        %v756 = vld [vmem:[%s4 + $0x18] sm:$0xff]
        %v757 = vld [vmem:[%s5] sm:$0x1]
        %v759 = vlaneseq
        %v760 = vshrl.u32 %v759, 7
        %v761 = vsub.s32 0, %v760
        %v762 = vrot.slane %v757, %v761
        %v765 = vsel %vm448, %v492, 0
        %v768 = vsel %vm448, %v493, 0
        %770 = vmatprep.subr.mxu0 0.0
        %771 = vmatpush1.msra.mxu0 %v753
        %772 = vmatprep.subr.mxu0 0.0
        %773 = vmatpush1.msra.mxu0 %v754
        %774 = vmatprep.subr.mxu0 0.0
        %775 = vmatpush1.msra.mxu0 %v755
        %776 = vmatprep.subr.mxu0 0.0
        %777 = vmatpush1.msra.mxu0 %v756
        %778 = vmatprep.subr.mxu0 0.0
        %779 = vmatpush1.msra.mxu0 0.0
        %780 = vmatprep.subr.mxu0 0.0
        %781 = vmatpush1.msra.mxu0 0.0
        %782 = vmatprep.subr.mxu0 0.0
        %783 = vmatpush1.msra.mxu0 0.0
        %784 = vmatprep.subr.mxu0 0.0
        %785 = vmatpush1.msra.mxu0 0.0
        %786 = vmatprep.subr.mxu0 0.0
        %787 = vmatpush1.msra.mxu0 0.0
        %788 = vmatprep.subr.mxu0 0.0
        %789 = vmatpush1.msra.mxu0 0.0
        %790 = vmatprep.subr.mxu0 0.0
        %791 = vmatpush1.msra.mxu0 0.0
        %792 = vmatprep.subr.mxu0 0.0
        %793 = vmatpush1.msra.mxu0 0.0
        %794 = vmatprep.subr.mxu0 0.0
        %795 = vmatpush1.msra.mxu0 0.0
        %796 = vmatprep.subr.mxu0 0.0
        %797 = vmatpush1.msra.mxu0 0.0
        %798 = vmatprep.subr.mxu0 0.0
        %799 = vmatpush1.msra.mxu0 0.0
        %800 = vmatprep.subr.mxu0 0.0
        %801 = vmatpush1.msra.mxu0 0.0
        %802 = vmatprep.subr.mxu0 0.0
        %803 = vmatpush1.msra.mxu0 0.0
        %804 = vmatprep.subr.mxu0 0.0
        %805 = vmatpush1.msra.mxu0 0.0
        %806 = vmatprep.subr.mxu0 0.0
        %807 = vmatpush1.msra.mxu0 0.0
        %808 = vmatprep.subr.mxu0 0.0
        %809 = vmatpush1.msra.mxu0 0.0
        %810 = vmatprep.subr.mxu0 0.0
        %811 = vmatpush1.msra.mxu0 0.0
        %812 = vmatprep.subr.mxu0 0.0
        %813 = vmatpush1.msra.mxu0 0.0
        %814 = vmatprep.subr.mxu0 0.0
        %815 = vmatpush1.msra.mxu0 0.0
        %816 = vmatprep.subr.mxu0 0.0
        %817 = vmatpush1.msra.mxu0 0.0
        %818 = vmatprep.subr.mxu0 0.0
        %819 = vmatpush1.msra.mxu0 0.0
        %820 = vmatprep.subr.mxu0 0.0
        %821 = vmatpush1.msra.mxu0 0.0
        %822 = vmatprep.subr.mxu0 0.0
        %823 = vmatpush1.msra.mxu0 0.0
        %824 = vmatprep.subr.mxu0 0.0
        %825 = vmatpush1.msra.mxu0 0.0
        %826 = vmatprep.subr.mxu0 0.0
        %827 = vmatpush1.msra.mxu0 0.0
        %828 = vmatprep.subr.mxu0 0.0
        %829 = vmatpush1.msra.mxu0 0.0
        %830 = vmatprep.subr.mxu0 0.0
        %831 = vmatpush1.msra.mxu0 0.0
        %832 = vmatprep.subr.mxu0 0.0
        %833 = vmatpush1.msra.mxu0 0.0
        %834 = vmatprep.mubr.f32.mxu0 0.0
        %835 = vmatmul.mubr.f32.gmra.mrb[0].mxu0 %v765
        %v836 = vpop.f32.mrb[0].mxu0
        %v837 = vadd.f32 %v762, %v836
        %v838 = vpop.f32.mrb[0].mxu0
        %839 = vmatprep.mubr.f32.mxu0 0.0
        %840 = vmatmul.mubr.f32.gmra.mrb[0].mxu0 %v768
        %v841 = vpop.f32.mrb[0].mxu0
        %v842 = vadd.f32 %v762, %v841
        %v843 = vpop.f32.mrb[0].mxu0
        %844 = vdwg.mxu0
        %v849 = vrot.slane %v750, 7
        %v850 = vsel %vm663, %v849, %v749
        %v851 = vrot.slane %v751, 6
        %v852 = vsel %vm666, %v851, %v850
        %v853 = vrot.slane %v752, 5
        %v854 = vsel %vm669, %v853, %v852
        %856 = vxpose.xlu0.b32.start [1/16] %v854, 128
        %857 = vxpose.xlu0.b32.cont [2/16] 0.0, 128
        %858 = vxpose.xlu0.b32.cont [3/16] 0.0, 128
        %859 = vxpose.xlu0.b32.cont [4/16] 0.0, 128
        %860 = vxpose.xlu0.b32.cont [5/16] 0.0, 128
        %861 = vxpose.xlu0.b32.cont [6/16] 0.0, 128
        %862 = vxpose.xlu0.b32.cont [7/16] 0.0, 128
        %863 = vxpose.xlu0.b32.cont [8/16] 0.0, 128
        %864 = vxpose.xlu0.b32.cont [9/16] 0.0, 128
        %865 = vxpose.xlu0.b32.cont [10/16] 0.0, 128
        %866 = vxpose.xlu0.b32.cont [11/16] 0.0, 128
        %867 = vxpose.xlu0.b32.cont [12/16] 0.0, 128
        %868 = vxpose.xlu0.b32.cont [13/16] 0.0, 128
        %869 = vxpose.xlu0.b32.cont [14/16] 0.0, 128
        %870 = vxpose.xlu0.b32.cont [15/16] 0.0, 128
        %871 = vxpose.xlu0.b32.end [16/16] 0.0, 128
        %v872 = vpop.trf.xlu0
        %v873 = vpop.trf.xlu0
        %v874 = vpop.trf.xlu0
        %v875 = vpop.trf.xlu0
        %v876 = vpop.trf.xlu0
        %v877 = vpop.trf.xlu0
        %v878 = vpop.trf.xlu0
        %v879 = vpop.trf.xlu0
        %v880 = vpop.trf.xlu0
        %v881 = vpop.trf.xlu0
        %v882 = vpop.trf.xlu0
        %v883 = vpop.trf.xlu0
        %v884 = vpop.trf.xlu0
        %v885 = vpop.trf.xlu0
        %v886 = vpop.trf.xlu0
        %v887 = vpop.trf.xlu0
        %v888 = vld [vmem:[%s6] sm:$0xf]
        %vm889 = vcmask 31744
        %v891 = vsel %vm889, %v872, 0
        %v894 = vsel %vm889, %v873, 0
        %vm896 = vcmask 1043456
        %v898 = vsel %vm896, %v888, 0
        %900 = vmatprep.subr.mxu0 0.0
        %901 = vmatpush1.msra.mxu0 %v898
        %902 = vmatprep.subr.mxu0 0.0
        %903 = vmatpush1.msra.mxu0 0.0
        %904 = vmatprep.subr.mxu0 0.0
        %905 = vmatpush1.msra.mxu0 0.0
        %906 = vmatprep.subr.mxu0 0.0
        %907 = vmatpush1.msra.mxu0 0.0
        %908 = vmatprep.subr.mxu0 0.0
        %909 = vmatpush1.msra.mxu0 0.0
        %910 = vmatprep.subr.mxu0 0.0
        %911 = vmatpush1.msra.mxu0 0.0
        %912 = vmatprep.subr.mxu0 0.0
        %913 = vmatpush1.msra.mxu0 0.0
        %914 = vmatprep.subr.mxu0 0.0
        %915 = vmatpush1.msra.mxu0 0.0
        %916 = vmatprep.subr.mxu0 0.0
        %917 = vmatpush1.msra.mxu0 0.0
        %918 = vmatprep.subr.mxu0 0.0
        %919 = vmatpush1.msra.mxu0 0.0
        %920 = vmatprep.subr.mxu0 0.0
        %921 = vmatpush1.msra.mxu0 0.0
        %922 = vmatprep.subr.mxu0 0.0
        %923 = vmatpush1.msra.mxu0 0.0
        %924 = vmatprep.subr.mxu0 0.0
        %925 = vmatpush1.msra.mxu0 0.0
        %926 = vmatprep.subr.mxu0 0.0
        %927 = vmatpush1.msra.mxu0 0.0
        %928 = vmatprep.subr.mxu0 0.0
        %929 = vmatpush1.msra.mxu0 0.0
        %930 = vmatprep.subr.mxu0 0.0
        %931 = vmatpush1.msra.mxu0 0.0
        %932 = vmatprep.subr.mxu0 0.0
        %933 = vmatpush1.msra.mxu0 0.0
        %934 = vmatprep.subr.mxu0 0.0
        %935 = vmatpush1.msra.mxu0 0.0
        %936 = vmatprep.subr.mxu0 0.0
        %937 = vmatpush1.msra.mxu0 0.0
        %938 = vmatprep.subr.mxu0 0.0
        %939 = vmatpush1.msra.mxu0 0.0
        %940 = vmatprep.subr.mxu0 0.0
        %941 = vmatpush1.msra.mxu0 0.0
        %942 = vmatprep.subr.mxu0 0.0
        %943 = vmatpush1.msra.mxu0 0.0
        %944 = vmatprep.subr.mxu0 0.0
        %945 = vmatpush1.msra.mxu0 0.0
        %946 = vmatprep.subr.mxu0 0.0
        %947 = vmatpush1.msra.mxu0 0.0
        %948 = vmatprep.subr.mxu0 0.0
        %949 = vmatpush1.msra.mxu0 0.0
        %950 = vmatprep.subr.mxu0 0.0
        %951 = vmatpush1.msra.mxu0 0.0
        %952 = vmatprep.subr.mxu0 0.0
        %953 = vmatpush1.msra.mxu0 0.0
        %954 = vmatprep.subr.mxu0 0.0
        %955 = vmatpush1.msra.mxu0 0.0
        %956 = vmatprep.subr.mxu0 0.0
        %957 = vmatpush1.msra.mxu0 0.0
        %958 = vmatprep.subr.mxu0 0.0
        %959 = vmatpush1.msra.mxu0 0.0
        %960 = vmatprep.subr.mxu0 0.0
        %961 = vmatpush1.msra.mxu0 0.0
        %962 = vmatprep.subr.mxu0 0.0
        %963 = vmatpush1.msra.mxu0 0.0
        %964 = vmatprep.mubr.f32.mxu0 0.0
        %965 = vmatmul.mubr.f32.gmra.mrb[0].mxu0 %v891
        %v966 = vpop.f32.mrb[0].mxu0
        %v967 = vadd.f32 0.0, %v966
        %v968 = vpop.f32.mrb[0].mxu0
        %969 = vmatprep.mubr.f32.mxu0 0.0
        %970 = vmatmul.mubr.f32.gmra.mrb[0].mxu0 %v894
        %v971 = vpop.f32.mrb[0].mxu0
        %v972 = vadd.f32 0.0, %v971
        %v973 = vpop.f32.mrb[0].mxu0
        %974 = vdwg.mxu0
        %v975 = vadd.f32 %v837, %v967
        %v976 = vadd.f32 %v842, %v972
        %v977 = vxor.u32 %v975, 2147483648
        %v978 = vxor.u32 %v976, 2147483648
        %v979 = vmul.f32 %v977, 1.442695
        %v980 = vpow.pop %v979
        %v981 = vmul.f32 %v978, 1.442695
        %v982 = vpow.pop %v981
        %v983 = vadd.f32 %v980, 1.0
        %v984 = vadd.f32 %v982, 1.0
        %v985 = vrcp.pop %v983
        %v986 = vmul.f32 1.0, %v985
        %v987 = vrcp.pop %v984
        %v988 = vmul.f32 1.0, %v987
        %v989 = vmul.f32 %v975, %v986
        %v990 = vmul.f32 %v976, %v988
        %v991 = vld [vmem:[%s7] sm:$0xff]
        %v992 = vld [vmem:[%s7 + $0x8] sm:$0xff]
        %v993 = vld [vmem:[%s7 + $0x10] sm:$0xff]
        %v994 = vld [vmem:[%s7 + $0x18] sm:$0xff]
        %v995 = vld [vmem:[%s7 + $0x20] sm:$0xff]
        %v996 = vld [vmem:[%s7 + $0x28] sm:$0xff]
        %v997 = vld [vmem:[%s7 + $0x30] sm:$0xff]
        %v998 = vld [vmem:[%s7 + $0x38] sm:$0xff]
        %v999 = vlaneseq
        %v1000 = vshrl.u32 %v999, 7
        %v1001 = vsub.s32 0, %v1000
        %v1002 = vrot.slane %v444, %v1001
        %vm1003 = vcmask 523264
        %v1005 = vsel %vm1003, %v989, 0
        %v1008 = vsel %vm1003, %v990, 0
        %1010 = vmatprep.subr.mxu0 0.0
        %1011 = vmatpush1.msra.mxu0 %v991
        %1012 = vmatprep.subr.mxu0 0.0
        %1013 = vmatpush1.msra.mxu0 %v992
        %1014 = vmatprep.subr.mxu0 0.0
        %1015 = vmatpush1.msra.mxu0 %v993
        %1016 = vmatprep.subr.mxu0 0.0
        %1017 = vmatpush1.msra.mxu0 %v994
        %1018 = vmatprep.subr.mxu0 0.0
        %1019 = vmatpush1.msra.mxu0 %v995
        %1020 = vmatprep.subr.mxu0 0.0
        %1021 = vmatpush1.msra.mxu0 %v996
        %1022 = vmatprep.subr.mxu0 0.0
        %1023 = vmatpush1.msra.mxu0 %v997
        %1024 = vmatprep.subr.mxu0 0.0
        %1025 = vmatpush1.msra.mxu0 %v998
        %1026 = vmatprep.subr.mxu0 0.0
        %1027 = vmatpush1.msra.mxu0 0.0
        %1028 = vmatprep.subr.mxu0 0.0
        %1029 = vmatpush1.msra.mxu0 0.0
        %1030 = vmatprep.subr.mxu0 0.0
        %1031 = vmatpush1.msra.mxu0 0.0
        %1032 = vmatprep.subr.mxu0 0.0
        %1033 = vmatpush1.msra.mxu0 0.0
        %1034 = vmatprep.subr.mxu0 0.0
        %1035 = vmatpush1.msra.mxu0 0.0
        %1036 = vmatprep.subr.mxu0 0.0
        %1037 = vmatpush1.msra.mxu0 0.0
        %1038 = vmatprep.subr.mxu0 0.0
        %1039 = vmatpush1.msra.mxu0 0.0
        %1040 = vmatprep.subr.mxu0 0.0
        %1041 = vmatpush1.msra.mxu0 0.0
        %1042 = vmatprep.subr.mxu0 0.0
        %1043 = vmatpush1.msra.mxu0 0.0
        %1044 = vmatprep.subr.mxu0 0.0
        %1045 = vmatpush1.msra.mxu0 0.0
        %1046 = vmatprep.subr.mxu0 0.0
        %1047 = vmatpush1.msra.mxu0 0.0
        %1048 = vmatprep.subr.mxu0 0.0
        %1049 = vmatpush1.msra.mxu0 0.0
        %1050 = vmatprep.subr.mxu0 0.0
        %1051 = vmatpush1.msra.mxu0 0.0
        %1052 = vmatprep.subr.mxu0 0.0
        %1053 = vmatpush1.msra.mxu0 0.0
        %1054 = vmatprep.subr.mxu0 0.0
        %1055 = vmatpush1.msra.mxu0 0.0
        %1056 = vmatprep.subr.mxu0 0.0
        %1057 = vmatpush1.msra.mxu0 0.0
        %1058 = vmatprep.subr.mxu0 0.0
        %1059 = vmatpush1.msra.mxu0 0.0
        %1060 = vmatprep.subr.mxu0 0.0
        %1061 = vmatpush1.msra.mxu0 0.0
        %1062 = vmatprep.subr.mxu0 0.0
        %1063 = vmatpush1.msra.mxu0 0.0
        %1064 = vmatprep.subr.mxu0 0.0
        %1065 = vmatpush1.msra.mxu0 0.0
        %1066 = vmatprep.subr.mxu0 0.0
        %1067 = vmatpush1.msra.mxu0 0.0
        %1068 = vmatprep.subr.mxu0 0.0
        %1069 = vmatpush1.msra.mxu0 0.0
        %1070 = vmatprep.subr.mxu0 0.0
        %1071 = vmatpush1.msra.mxu0 0.0
        %1072 = vmatprep.subr.mxu0 0.0
        %1073 = vmatpush1.msra.mxu0 0.0
        %1074 = vmatprep.mubr.f32.mxu0 0.0
        %1075 = vmatmul.mubr.f32.gmra.mrb[0].mxu0 %v1005
        %v1076 = vpop.f32.mrb[0].mxu0
        %v1077 = vadd.f32 %v1002, %v1076
        %v1078 = vpop.f32.mrb[0].mxu0
        %1079 = vmatprep.mubr.f32.mxu0 0.0
        %1080 = vmatmul.mubr.f32.gmra.mrb[0].mxu0 %v1008
        %v1081 = vpop.f32.mrb[0].mxu0
        %v1082 = vadd.f32 %v1002, %v1081
        %v1083 = vpop.f32.mrb[0].mxu0
        %1084 = vdwg.mxu0
        %1085 = vst.msk [vmem:[%s415] sm:$0xff] %vm448, %v1077
        %1086 = vst.msk [vmem:[%s415 + $0x8] sm:$0xff] %vm448, %v1082
        %v1087 = vxor.u32 %v837, 2147483648
        %v1088 = vxor.u32 %v842, 2147483648
        %v1089 = vmul.f32 %v1087, 1.442695
        %v1090 = vpow.pop %v1089
        %v1091 = vmul.f32 %v1088, 1.442695
        %v1092 = vpow.pop %v1091
        %v1093 = vadd.f32 %v1090, 1.0
        %v1094 = vadd.f32 %v1092, 1.0
        %v1095 = vrcp.pop %v1093
        %v1096 = vmul.f32 1.0, %v1095
        %v1097 = vrcp.pop %v1094
        %v1098 = vmul.f32 1.0, %v1097
        %v1099 = vmul.f32 %v837, %v1096
        %v1100 = vmul.f32 %v842, %v1098
        %v1101 = vld [vmem:[%s8] sm:$0xf]
        %v1102 = vlaneseq
        %v1103 = vshrl.u32 %v1102, 7
        %v1104 = vsub.s32 0, %v1103
        %v1105 = vrot.slane %v447, %v1104
        %1108 = vrot.lane.b32.xlu0 %v1099, 64
        %v1109 = vpop.permute.xlu0 %1108
        %1110 = vrot.lane.b32.xlu0 %v1100, 64
        %v1111 = vpop.permute.xlu0 %1110
        %v1112 = vsel %vm889, %v1109, 0
        %v1114 = vsel %vm889, %v1111, 0
        %v1117 = vsel %vm896, %v1101, 0
        %1119 = vmatprep.subr.mxu0 0.0
        %1120 = vmatpush1.msra.mxu0 %v1117
        %1121 = vmatprep.subr.mxu0 0.0
        %1122 = vmatpush1.msra.mxu0 0.0
        %1123 = vmatprep.subr.mxu0 0.0
        %1124 = vmatpush1.msra.mxu0 0.0
        %1125 = vmatprep.subr.mxu0 0.0
        %1126 = vmatpush1.msra.mxu0 0.0
        %1127 = vmatprep.subr.mxu0 0.0
        %1128 = vmatpush1.msra.mxu0 0.0
        %1129 = vmatprep.subr.mxu0 0.0
        %1130 = vmatpush1.msra.mxu0 0.0
        %1131 = vmatprep.subr.mxu0 0.0
        %1132 = vmatpush1.msra.mxu0 0.0
        %1133 = vmatprep.subr.mxu0 0.0
        %1134 = vmatpush1.msra.mxu0 0.0
        %1135 = vmatprep.subr.mxu0 0.0
        %1136 = vmatpush1.msra.mxu0 0.0
        %1137 = vmatprep.subr.mxu0 0.0
        %1138 = vmatpush1.msra.mxu0 0.0
        %1139 = vmatprep.subr.mxu0 0.0
        %1140 = vmatpush1.msra.mxu0 0.0
        %1141 = vmatprep.subr.mxu0 0.0
        %1142 = vmatpush1.msra.mxu0 0.0
        %1143 = vmatprep.subr.mxu0 0.0
        %1144 = vmatpush1.msra.mxu0 0.0
        %1145 = vmatprep.subr.mxu0 0.0
        %1146 = vmatpush1.msra.mxu0 0.0
        %1147 = vmatprep.subr.mxu0 0.0
        %1148 = vmatpush1.msra.mxu0 0.0
        %1149 = vmatprep.subr.mxu0 0.0
        %1150 = vmatpush1.msra.mxu0 0.0
        %1151 = vmatprep.subr.mxu0 0.0
        %1152 = vmatpush1.msra.mxu0 0.0
        %1153 = vmatprep.subr.mxu0 0.0
        %1154 = vmatpush1.msra.mxu0 0.0
        %1155 = vmatprep.subr.mxu0 0.0
        %1156 = vmatpush1.msra.mxu0 0.0
        %1157 = vmatprep.subr.mxu0 0.0
        %1158 = vmatpush1.msra.mxu0 0.0
        %1159 = vmatprep.subr.mxu0 0.0
        %1160 = vmatpush1.msra.mxu0 0.0
        %1161 = vmatprep.subr.mxu0 0.0
        %1162 = vmatpush1.msra.mxu0 0.0
        %1163 = vmatprep.subr.mxu0 0.0
        %1164 = vmatpush1.msra.mxu0 0.0
        %1165 = vmatprep.subr.mxu0 0.0
        %1166 = vmatpush1.msra.mxu0 0.0
        %1167 = vmatprep.subr.mxu0 0.0
        %1168 = vmatpush1.msra.mxu0 0.0
        %1169 = vmatprep.subr.mxu0 0.0
        %1170 = vmatpush1.msra.mxu0 0.0
        %1171 = vmatprep.subr.mxu0 0.0
        %1172 = vmatpush1.msra.mxu0 0.0
        %1173 = vmatprep.subr.mxu0 0.0
        %1174 = vmatpush1.msra.mxu0 0.0
        %1175 = vmatprep.subr.mxu0 0.0
        %1176 = vmatpush1.msra.mxu0 0.0
        %1177 = vmatprep.subr.mxu0 0.0
        %1178 = vmatpush1.msra.mxu0 0.0
        %1179 = vmatprep.subr.mxu0 0.0
        %1180 = vmatpush1.msra.mxu0 0.0
        %1181 = vmatprep.subr.mxu0 0.0
        %1182 = vmatpush1.msra.mxu0 0.0
        %1183 = vmatprep.mubr.f32.mxu0 0.0
        %1184 = vmatmul.mubr.f32.gmra.mrb[0].mxu0 %v1112
        %v1185 = vpop.f32.mrb[0].mxu0
        %v1186 = vadd.f32 %v1105, %v1185
        %v1187 = vpop.f32.mrb[0].mxu0
        %1188 = vmatprep.mubr.f32.mxu0 0.0
        %1189 = vmatmul.mubr.f32.gmra.mrb[0].mxu0 %v1114
        %v1190 = vpop.f32.mrb[0].mxu0
        %v1191 = vadd.f32 %v1105, %v1190
        %v1192 = vpop.f32.mrb[0].mxu0
        %1193 = vdwg.mxu0
        %1194 = vxpose.xlu0.b32.start [1/16] %v1186, 128
        %1195 = vxpose.xlu0.b32.cont [2/16] %v1191, 128
        %1196 = vxpose.xlu0.b32.cont [3/16] 0.0, 128
        %1197 = vxpose.xlu0.b32.cont [4/16] 0.0, 128
        %1198 = vxpose.xlu0.b32.cont [5/16] 0.0, 128
        %1199 = vxpose.xlu0.b32.cont [6/16] 0.0, 128
        %1200 = vxpose.xlu0.b32.cont [7/16] 0.0, 128
        %1201 = vxpose.xlu0.b32.cont [8/16] 0.0, 128
        %1202 = vxpose.xlu0.b32.cont [9/16] 0.0, 128
        %1203 = vxpose.xlu0.b32.cont [10/16] 0.0, 128
        %1204 = vxpose.xlu0.b32.cont [11/16] 0.0, 128
        %1205 = vxpose.xlu0.b32.cont [12/16] 0.0, 128
        %1206 = vxpose.xlu0.b32.cont [13/16] 0.0, 128
        %1207 = vxpose.xlu0.b32.cont [14/16] 0.0, 128
        %1208 = vxpose.xlu0.b32.cont [15/16] 0.0, 128
        %1209 = vxpose.xlu0.b32.end [16/16] 0.0, 128
        %v1210 = vpop.trf.xlu0
        %v1211 = vpop.trf.xlu0
        %v1212 = vpop.trf.xlu0
        %v1213 = vpop.trf.xlu0
        %v1214 = vpop.trf.xlu0
        %v1215 = vpop.trf.xlu0
        %v1216 = vpop.trf.xlu0
        %v1217 = vpop.trf.xlu0
        %v1218 = vpop.trf.xlu0
        %v1219 = vpop.trf.xlu0
        %v1220 = vpop.trf.xlu0
        %v1221 = vpop.trf.xlu0
        %v1222 = vpop.trf.xlu0
        %v1223 = vpop.trf.xlu0
        %v1224 = vpop.trf.xlu0
        %v1225 = vpop.trf.xlu0
        %v1226 = vlaneseq
        %v1227 = vshrl.u32 %v1226, 7
        %v1228 = vsub.s32 0, %v1227
        %v1229 = vrot.slane %v446, %v1228
        %1231 = vbcast.lane.b32.xlu0 %v1229, 256
        %v1232 = vpop.permute.xlu0 %1231
        %v1233 = vlaneseq
        %v1234 = vshrl.u32 %v1233, 7
        %v1235 = vsub.s32 0, %v1234
        %v1236 = vrot.slane %v1232, %v1235
        %v1237 = vlaneseq
        %v1238 = vshrl.u32 %v1237, 7
        %v1239 = vsub.s32 1, %v1238
        %v1240 = vrot.slane %v1232, %v1239
        %v1241 = vlaneseq
        %v1242 = vshrl.u32 %v1241, 7
        %v1243 = vsub.s32 2, %v1242
        %v1244 = vrot.slane %v1232, %v1243
        %v1245 = vlaneseq
        %v1246 = vshrl.u32 %v1245, 7
        %v1247 = vsub.s32 3, %v1246
        %v1248 = vrot.slane %v1232, %v1247
        %v1249 = vmul.f32 %v728, %v1236
        %v1250 = vmul.f32 %v729, %v1240
        %v1251 = vmul.f32 %v730, %v1244
        %v1252 = vmul.f32 %v731, %v1248
        %v1253 = vsel %vm548, %v1249, 0.0
        %v1254 = vsel %vm548, %v1250, 0.0
        %v1255 = vadd.f32 %v1253, %v1254
        %v1256 = vsel %vm548, %v1251, 0.0
        %v1257 = vadd.f32 %v1255, %v1256
        %v1258 = vsel %vm548, %v1252, 0.0
        %v1259 = vadd.f32 %v1257, %v1258
        %v1262 = vunpack.c.l.s4 1966171168
        %v1263 = vunpack.c.0.s8 %v1262
        %v1264 = vlaneseq
        %v1265 = vshrl.u32 %v1264, 7
        %v1266 = vsub.s32 %v1263, %v1265
        %v1267 = vrot.slane %v1210, %v1266
        %v1268 = vcombine.high %v1267, %v1267
        %v1270 = vunpack.c.l.s4 1966171168
        %v1271 = vunpack.c.0.s8 %v1270
        %v1272 = vlaneseq
        %v1273 = vshrl.u32 %v1272, 7
        %v1274 = vsub.s32 %v1271, %v1273
        %v1275 = vrot.slane %v1267, %v1274
        %v1277 = vunpack.c.l.s4 1966171168
        %v1278 = vunpack.c.0.s8 %v1277
        %v1279 = vlaneseq
        %v1280 = vshrl.u32 %v1279, 7
        %v1281 = vsub.s32 %v1278, %v1280
        %v1282 = vrot.slane %v1268, %v1281
        %v1283 = vcombine.high %v1275, %v1275
        %v1284 = vcombine.high %v1282, %v1282
        %v1285 = vlaneseq
        %v1286 = vshrl.u32 %v1285, 7
        %v1287 = vsub.s32 0, %v1286
        %v1288 = vrot.slane %v1275, %v1287
        %v1289 = vlaneseq
        %v1290 = vshrl.u32 %v1289, 7
        %v1291 = vsub.s32 0, %v1290
        %v1292 = vrot.slane %v1282, %v1291
        %v1293 = vlaneseq
        %v1294 = vshrl.u32 %v1293, 7
        %v1295 = vsub.s32 0, %v1294
        %v1296 = vrot.slane %v1283, %v1295
        %v1297 = vlaneseq
        %v1298 = vshrl.u32 %v1297, 7
        %v1299 = vsub.s32 0, %v1298
        %v1300 = vrot.slane %v1284, %v1299
        %v1305 = vmul.f32 %v1288, %v1259
        %v1306 = vmul.f32 %v1292, %v1259
        %v1307 = vmul.f32 %v1296, %v1259
        %v1308 = vmul.f32 %v1300, %v1259
        %1309 = vst.msk [vmem:[%s434] sm:$0x7] %vm548, %v1305
        %1310 = vst.msk [vmem:[%s434 + $0x4] sm:$0x7] %vm548, %v1306
        %1311 = vst.msk [vmem:[%s434 + $0x8] sm:$0x7] %vm548, %v1307
        %1312 = vst.msk [vmem:[%s434 + $0xc] sm:$0x7] %vm548, %v1308
        %p1313 = scmp.lt.s32.totalorder %s26, 1
        %s1314 = scalar_select %p1313, %s26, 1
        %s1315 = smul.addr %s1314, 4
        %s1316 = smul.addr %s1315, 4
        %s1317 = scalar_lea.vmem %s10, %s1316
        %s1318 = sand.u32 %s285, 1
        %s1319 = scalar_lea.sflag [#allocation3], %s1318
        %s1320 = sand.u32 %s285, 1
        %s1321 = smul.addr %s1320, 16
        %s1322 = scalar_lea.vmem [#allocation2], %s1321
        // Predicated region
        $region61: #{node_feed_forward.1} parent=59 // pred_check
          %p1323 = pneg %p269
        $region62: #{node_feed_forward.1} parent=59 // pred_check_branch
          %1325 = sbr.rel (%p1323) target = $region64
        $region63: #{node_feed_forward.1} parent=59 // pred_region
          _
        $region64: #{node_feed_forward.1} parent=59 // pred_fallthru
          _
        // Predicated region
        $region65: #{node_feed_forward.1} parent=59 // pred_check
          %p1326 = pneg %p295
        $region66: #{node_feed_forward.1} parent=59 // pred_check_branch
          %1328 = sbr.rel (%p1326) target = $region68
        $region67: #{node_feed_forward.1} parent=59 // pred_region
          %s1330 = ssub.s32 256, 256
          %1331 = vsyncadd %s1319, %s1330
          %s1332 = smul.addr %s26, 2
          %s1333 = smul.addr %s1332, 128
          %s1334 = scalar_lea.hbm %s11, %s1333
          %s1335 = sshll.u32 %s1322, 4
          %s1336 = int_to_ptr.vmem [resolvable:$true] %s1335
          %1341 = dma.vmem_to_hbm [thread:$0]  %s1336, 256, %s1334, %s1319, 128, 128, 8
        $region68: #{node_feed_forward.1} parent=59 // pred_fallthru
          _
      $region60: #{node_feed_forward.1} parent=5 // pred_fallthru
        _
      %p1342 = scmp.le.s32.totalorder 2, %s21
      // Predicated region
      $region69: #{node_feed_forward.1} parent=5 // pred_check
        %p1343 = pneg %p1342
      $region70: #{node_feed_forward.1} parent=5 // pred_check_branch
        %1345 = sbr.rel (%p1343) target = $region72
      $region71: #{node_feed_forward.1} parent=5 // pred_region
        %s1346 = ssub.s32 %s21, 2
        // Predicated region
        $region73: #{node_feed_forward.1} parent=71 // pred_check
          %p1347 = pneg %p275
        $region74: #{node_feed_forward.1} parent=71 // pred_check_branch
          %1349 = sbr.rel (%p1347) target = $region76
        $region75: #{node_feed_forward.1} parent=71 // pred_region
          %p1350 = scmp.lt.s32.totalorder %s27, 1
          %s1351 = scalar_select %p1350, %s27, 1
          %s1352 = smul.addr %s1351, 4
          %s1353 = smul.addr %s1352, 4
          %s1354 = scalar_lea.vmem %s10, %s1353
        $region76: #{node_feed_forward.1} parent=71 // pred_fallthru
          _
        // Predicated region
        $region77: #{node_feed_forward.1} parent=71 // pred_check
          %p1355 = pneg %p301
        $region78: #{node_feed_forward.1} parent=71 // pred_check_branch
          %1357 = sbr.rel (%p1355) target = $region80
        $region79: #{node_feed_forward.1} parent=71 // pred_region
          %s1358 = sand.u32 %s286, 1
          %s1359 = scalar_lea.sflag [#allocation3], %s1358
          %s1360 = sand.u32 %s286, 1
          %s1361 = smul.addr %s1360, 16
          %s1362 = scalar_lea.vmem [#allocation2], %s1361
          %1363 = dma.done %s1359, 256
        $region80: #{node_feed_forward.1} parent=71 // pred_fallthru
          _
      $region72: #{node_feed_forward.1} parent=5 // pred_fallthru
        _
    $region6: #{node_feed_forward.1} parent=1 // loop_footer
      %s25 = sadd.s32 1, %s21
    $region7: #{node_feed_forward.1} parent=1 // loop_footer_branch
      %20 = sbr.rel target = $region3
    $region8: #{node_feed_forward.1} parent=1 // loop_exit
      _
    %1364 = vsyncpa [#allocation3], 1
    %s1365 = scalar_lea.sflag [#allocation3], 1
    %1366 = vsyncpa %s1365, 1

</llo_original>
